<compile_context>
chip_gen: v7x
topology: tpu7x:2x2x1
jax: 0.10.0
libtpu: 0.0.40
codegen_flags: <defaults>
</compile_context>

<pallas_src>
import functools

import jax
import jax.numpy as jnp
from jax import lax
from jax.experimental import pallas as pl
from jax.experimental.pallas import tpu as pltpu

NEG_BIG = -1e30  # additive mask for non-edges (finite, so max-subtraction keeps exp well-defined)


# ----------------------------- in-kernel helpers ----------------------------

def _attend(e_src, e_dst, mask_bias, h_src, head_mask, heads):
    """Masked-softmax neighborhood aggregation, lane-dense accumulation over heads.

    e_src:     [heads, Ns]  per-source attention logits
    e_dst:     [tm, heads]  per-target attention logits
    mask_bias: [tm, Ns]     additive mask (0 for edge j->i, -1e30 otherwise)
    h_src:     [Ns, F]      projected source features (f32)
    head_mask: [heads, F]   per-head lane mask (f32) or None (single head)
    returns    [tm, F]      f32 aggregation (only head-g lanes touched by head g)
    """
    out = None
    for g in range(heads):                                   # static unroll; heads is tiny
        s = e_dst[:, g:g + 1] + e_src[g:g + 1, :]            # [tm, Ns]
        s = jnp.maximum(s, 0.2 * s) + mask_bias              # LeakyReLU(0.2), then additive mask
        m = jnp.max(s, axis=-1, keepdims=True)
        p = jnp.exp(s - m)                                   # masked entries underflow to ~0
        denom = jnp.maximum(jnp.sum(p, axis=-1, keepdims=True), 1e-20)
        rhs = h_src if head_mask is None else h_src * head_mask[g:g + 1, :]
        agg = jnp.dot(p.astype(jnp.bfloat16), rhs.astype(jnp.bfloat16),
                      preferred_element_type=jnp.float32)    # MXU, bf16 operands, f32 acc
        agg = agg * pl.reciprocal(denom, approx=True)        # normalize after matmul (EUP)
        out = agg if out is None else out + agg              # lane-dense accumulate (no concat)
    return out


def _gat_layer0_kernel(nheads,
                       xs_ref, xt_ref, bias_ref, w0_ref, a0s_ref, a0d_ref,
                       hmask_ref, bn_a_ref, bn_b_ref, z_ref):
    # Source-side projection over the whole graph (recomputed per row tile -- cheap),
    # target-side projection only for this tile's rows.
    h_src = jnp.dot(xs_ref[...], w0_ref[...], preferred_element_type=jnp.float32)   # [N, hidden]
    h_dst = jnp.dot(xt_ref[...], w0_ref[...], preferred_element_type=jnp.float32)   # [tm, hidden]
    # All-head attention logits via block-diagonal packings (one MXU matmul each).
    e_src = lax.dot_general(a0s_ref[...], h_src, (((1,), (1,)), ((), ())),
                            preferred_element_type=jnp.float32)                      # [H, N]
    e_dst = jnp.dot(h_dst, a0d_ref[...], preferred_element_type=jnp.float32)         # [tm, H]

    z = _attend(e_src, e_dst, bias_ref[...], h_src, hmask_ref[...], nheads)          # [tm, hidden]
    # Fused conv-bias + BatchNorm (eval) affine, then ReLU. Dropout = identity in eval.
    z = jnp.maximum(z * bn_a_ref[...] + bn_b_ref[...], 0.0)
    z_ref[...] = z.astype(z_ref.dtype)


def _gat_layer1_kernel(out_c,
                       zs_ref, zt_ref, bias_ref, w1_ref, a1s_ref, a1d_ref, b1_ref,
                       out_ref):
    h_src = jnp.dot(zs_ref[...], w1_ref[...], preferred_element_type=jnp.float32)    # [N, out_c]
    h_dst = jnp.dot(zt_ref[...], w1_ref[...], preferred_element_type=jnp.float32)    # [tm, out_c]
    e_src = lax.dot_general(a1s_ref[...], h_src, (((1,), (1,)), ((), ())),
                            preferred_element_type=jnp.float32)                       # [1, N]
    e_dst = jnp.dot(h_dst, a1d_ref[...], preferred_element_type=jnp.float32)          # [tm, 1]

    z1 = _attend(e_src, e_dst, bias_ref[...], h_src, None, 1) + b1_ref[...]           # [tm, out_c]

    # log_softmax over classes
    m = jnp.max(z1, axis=-1, keepdims=True)
    zz = z1 - m
    lse = jnp.log(jnp.sum(jnp.exp(zz), axis=-1, keepdims=True))

    # Packed lane-dense output: [:, :out_c] = log_probs, [:, out_c:] = embedding.
    out_ref[:, :out_c] = zz - lse
    out_ref[:, out_c:] = z1


# ----------------------- one-time parameter preparation ---------------------

def _pack_src_rows(a):
    """[H, F] -> [H, H*F] block-diagonal: row g holds a[g] in columns g*F:(g+1)*F."""
    H, F = a.shape
    eye = jnp.eye(H, dtype=a.dtype)
    return (eye[:, :, None] * a[None, :, :]).reshape(H, H * F)


def _pack_dst_cols(a):
    """[H, F] -> [H*F, H] block-diagonal: column g holds a[g] in rows g*F:(g+1)*F."""
    H, F = a.shape
    eye = jnp.eye(H, dtype=a.dtype)
    return (a[:, :, None] * eye[:, None, :]).reshape(H * F, H)


def prepare_params(params, nheads):
    """Hoisted, pure-function-of-weights prep: packings, bf16 casts, BN-affine fold."""
    W0 = params["conv0"]["W"]
    hidden = W0.shape[1]
    f_out = hidden // nheads
    W1 = params["conv1"]["W"]
    out_c = W1.shape[1]

    a0_src = params["conv0"]["a_src"].reshape(nheads, f_out)
    a0_dst = params["conv0"]["a_dst"].reshape(nheads, f_out)
    a1_src = params["conv1"]["a_src"].reshape(1, out_c)
    a1_dst = params["conv1"]["a_dst"].reshape(1, out_c)

    # Fold conv0 bias + BatchNorm1d (eval / running stats) into one affine: z*A + B.
    bn = params["bn0"]
    A = bn["gamma"] * lax.rsqrt(bn["var"] + 1e-5)
    B = bn["beta"] + (params["conv0"]["bias"] - bn["mean"]) * A

    # Per-head lane masks for concat-free lane-dense aggregation.
    head_mask = jnp.repeat(jnp.eye(nheads, dtype=jnp.float32), f_out, axis=1)  # [H, hidden]

    return {
        "W0": W0.astype(jnp.bfloat16),
        "a0s": _pack_src_rows(a0_src),
        "a0d": _pack_dst_cols(a0_dst),
        "head_mask": head_mask,
        "bn_a": A.reshape(1, hidden),
        "bn_b": B.reshape(1, hidden),
        "W1": W1.astype(jnp.bfloat16),
        "a1s": a1_src,
        "a1d": a1_dst.reshape(out_c, 1),
        "b1": params["conv1"]["bias"].reshape(1, out_c),
    }


# --------------------------------- forward -----------------------------------

def _row_tile(n):
    for c in (128, 64, 32, 16, 8):
        if n % c == 0 and n // c >= 2:
            return c
    return n


@jax.jit
def gat_forward(x, adj, prep):
    N, in_c = x.shape
    nheads = prep["head_mask"].shape[0]
    hidden = prep["W0"].shape[1]
    out_c = prep["W1"].shape[1]
    tm = _row_tile(N)
    grid = (N // tm,)

    x_b = x.astype(jnp.bfloat16)
    # Adjacency -> additive softmax bias (0 / -1e30). Self-loops are expected (PyG adds them);
    # a fully masked row still stays finite thanks to max-subtraction + the denom clamp.
    mask_bias = jnp.where(adj > 0.0, 0.0, NEG_BIG).astype(jnp.float32)

    vmem = pltpu.VMEM
    full2 = lambda r, c: pl.BlockSpec((r, c), lambda i: (0, 0), memory_space=vmem)
    rows = lambda r, c: pl.BlockSpec((r, c), lambda i: (i, 0), memory_space=vmem)

    cparams = pltpu.CompilerParams(dimension_semantics=("parallel",),
                                   vmem_limit_bytes=32 * 1024 * 1024)

    # ---- layer 0: multi-head GATConv + fused bias/BN affine + ReLU -> bf16 z ----
    z = pl.pallas_call(
        functools.partial(_gat_layer0_kernel, nheads),
        grid=grid,
        in_specs=[full2(N, in_c),         # x (sources, full graph)
                  rows(tm, in_c),         # x (targets, this row tile)
                  rows(tm, N),            # additive mask bias row tile
                  full2(in_c, hidden),    # W0 (bf16)
                  full2(nheads, hidden),  # a_src (block-diag packed)
                  full2(hidden, nheads),  # a_dst (block-diag packed)
                  full2(nheads, hidden),  # per-head lane masks
                  full2(1, hidden),       # BN-affine scale
                  full2(1, hidden)],      # BN-affine shift
        out_specs=rows(tm, hidden),
        out_shape=jax.ShapeDtypeStruct((N, hidden), jnp.bfloat16),
        compiler_params=cparams,
    )(x_b, x_b, mask_bias, prep["W0"], prep["a0s"], prep["a0d"],
      prep["head_mask"], prep["bn_a"], prep["bn_b"])

    # ---- layer 1: single-head GATConv + log_softmax, packed lane-dense output ----
    packed = pl.pallas_call(
        functools.partial(_gat_layer1_kernel, out_c),
        grid=grid,
        in_specs=[full2(N, hidden),       # z (sources, full graph, bf16)
                  rows(tm, hidden),       # z (targets, this row tile)
                  rows(tm, N),            # additive mask bias row tile
                  full2(hidden, out_c),   # W1 (bf16)
                  full2(1, out_c),        # a_src
                  full2(out_c, 1),        # a_dst
                  full2(1, out_c)],       # conv1 bias
        out_specs=rows(tm, 2 * out_c),
        out_shape=jax.ShapeDtypeStruct((N, 2 * out_c), jnp.float32),
        compiler_params=cparams,
    )(z, z, mask_bias, prep["W1"], prep["a1s"], prep["a1d"], prep["b1"])

    return packed[:, :out_c], packed[:, out_c:]


# ------------------------------ model params --------------------------------

def init_params(key, in_c, hidden, out_c, nheads):
    f = hidden // nheads
    k = jax.random.split(key, 6)

    def glorot(kk, shape):
        fan = shape[0] + shape[-1]
        return jax.random.uniform(kk, shape, jnp.float32, -1.0, 1.0) * jnp.sqrt(6.0 / fan)

    return {
        "conv0": {
            "W": glorot(k[0], (in_c, nheads * f)),
            "a_src": glorot(k[1], (nheads, 1, f)),
            "a_dst": glorot(k[2], (nheads, 1, f)),
            "bias": jnp.zeros((nheads * f,), jnp.float32),   # PyG inits bias to zeros
        },
        "bn0": {
            "gamma": jnp.ones((hidden,), jnp.float32),
            "beta": jnp.zeros((hidden,), jnp.float32),
            "mean": jnp.zeros((hidden,), jnp.float32),
            "var": jnp.ones((hidden,), jnp.float32),
        },
        "conv1": {
            "W": glorot(k[3], (hidden, out_c)),
            "a_src": glorot(k[4], (1, 1, out_c)),
            "a_dst": glorot(k[5], (1, 1, out_c)),
            "bias": jnp.zeros((out_c,), jnp.float32),
        },
    }


if __name__ == "__main__":
    N, in_c, hidden, out_c, nheads = 64, 16, 32, 8, 4

    key = jax.random.PRNGKey(0)
    kx, ka, kp = jax.random.split(key, 3)

    x = jax.random.normal(kx, (N, in_c), jnp.float32)
    adj = (jax.random.uniform(ka, (N, N)) < 0.1).astype(jnp.float32)
    adj = jnp.maximum(adj, adj.T)                                  # undirected
    adj = jnp.maximum(adj, jnp.eye(N, dtype=jnp.float32))          # self loops (PyG adds these)

    params = init_params(kp, in_c, hidden, out_c, nheads)
    prep = prepare_params(params, nheads)                          # one-time weight prep (hoisted)

    log_probs, embedding = gat_forward(x, adj, prep)
    jax.block_until_ready((log_probs, embedding))

    assert log_probs.shape == (N, out_c) and embedding.shape == (N, out_c)
    assert bool(jnp.all(jnp.isfinite(log_probs))) and bool(jnp.all(jnp.isfinite(embedding)))
    print("KERNEL_OK")
</pallas_src>

<mosaic_0001>
module attributes {stable_mosaic.version = 11 : i64} {
  func.func @_gat_layer1_kernel(%arg0: i32, %arg1: memref<64x32xbf16, #tpu.memory_space<vmem>>, %arg2: memref<32x32xbf16, #tpu.memory_space<vmem>>, %arg3: memref<32x64xf32, #tpu.memory_space<vmem>>, %arg4: memref<32x8xbf16, #tpu.memory_space<vmem>>, %arg5: memref<1x8xf32, #tpu.memory_space<vmem>>, %arg6: memref<8x1xf32, #tpu.memory_space<vmem>>, %arg7: memref<1x8xf32, #tpu.memory_space<vmem>>, %arg8: memref<32x16xf32, #tpu.memory_space<vmem>>) attributes {dimension_semantics = [#tpu.dimension_semantics<parallel>], iteration_bounds = array<i64: 2>, scalar_prefetch = 0 : i64, scratch_operands = 0 : i64, tpu.core_type = #tpu.core_type<tc>, window_params = [{pipeline_mode = #tpu.pipeline_mode<synchronous>, transform_indices = @transform_0, window_bounds = array<i64: 64, 32>}, {transform_indices = @transform_1, window_bounds = array<i64: 32, 32>}, {transform_indices = @transform_2, window_bounds = array<i64: 32, 64>}, {pipeline_mode = #tpu.pipeline_mode<synchronous>, transform_indices = @transform_3, window_bounds = array<i64: 32, 8>}, {pipeline_mode = #tpu.pipeline_mode<synchronous>, transform_indices = @transform_4, window_bounds = array<i64: 1, 8>}, {pipeline_mode = #tpu.pipeline_mode<synchronous>, transform_indices = @transform_5, window_bounds = array<i64: 8, 1>}, {pipeline_mode = #tpu.pipeline_mode<synchronous>, transform_indices = @transform_6, window_bounds = array<i64: 1, 8>}, {transform_indices = @transform_7, window_bounds = array<i64: 32, 16>}]} {
    %c0 = arith.constant 0 : index
    %c0_0 = arith.constant 0 : index
    %0 = vector.load %arg1[%c0, %c0_0] : memref<64x32xbf16, #tpu.memory_space<vmem>>, vector<64x32xbf16>
    %c0_1 = arith.constant 0 : index
    %c0_2 = arith.constant 0 : index
    %1 = vector.load %arg4[%c0_1, %c0_2] : memref<32x8xbf16, #tpu.memory_space<vmem>>, vector<32x8xbf16>
    %cst = arith.constant dense<0.000000e+00> : vector<64x8xf32>
    %2 = tpu.matmul %0, %1, %cst {dimension_numbers = #tpu.dot_dimension_numbers<[1], [0], [0], [1], [0, 0, 1, 1], [], []>} : vector<64x32xbf16>, vector<32x8xbf16>, vector<64x8xf32> -> vector<64x8xf32>
    %c0_3 = arith.constant 0 : index
    %c0_4 = arith.constant 0 : index
    %3 = vector.load %arg2[%c0_3, %c0_4] : memref<32x32xbf16, #tpu.memory_space<vmem>>, vector<32x32xbf16>
    %c0_5 = arith.constant 0 : index
    %c0_6 = arith.constant 0 : index
    %4 = vector.load %arg4[%c0_5, %c0_6] : memref<32x8xbf16, #tpu.memory_space<vmem>>, vector<32x8xbf16>
    %cst_7 = arith.constant dense<0.000000e+00> : vector<32x8xf32>
    %5 = tpu.matmul %3, %4, %cst_7 {dimension_numbers = #tpu.dot_dimension_numbers<[1], [0], [0], [1], [0, 0, 1, 1], [], []>} : vector<32x32xbf16>, vector<32x8xbf16>, vector<32x8xf32> -> vector<32x8xf32>
    %c0_8 = arith.constant 0 : index
    %c0_9 = arith.constant 0 : index
    %6 = vector.load %arg5[%c0_8, %c0_9] : memref<1x8xf32, #tpu.memory_space<vmem>>, vector<1x8xf32>
    %cst_10 = arith.constant dense<0.000000e+00> : vector<1x64xf32>
    %7 = tpu.matmul %6, %2, %cst_10 {dimension_numbers = #tpu.dot_dimension_numbers<[1], [1], [0], [0], [0, 0, 1, 0], [], []>} : vector<1x8xf32>, vector<64x8xf32>, vector<1x64xf32> -> vector<1x64xf32>
    %c0_11 = arith.constant 0 : index
    %c0_12 = arith.constant 0 : index
    %8 = vector.load %arg6[%c0_11, %c0_12] : memref<8x1xf32, #tpu.memory_space<vmem>>, vector<8x1xf32>
    %cst_13 = arith.constant dense<0.000000e+00> : vector<32x1xf32>
    %9 = tpu.matmul %5, %8, %cst_13 {dimension_numbers = #tpu.dot_dimension_numbers<[1], [0], [0], [1], [0, 0, 1, 1], [], []>} : vector<32x8xf32>, vector<8x1xf32>, vector<32x1xf32> -> vector<32x1xf32>
    %c0_14 = arith.constant 0 : index
    %c0_15 = arith.constant 0 : index
    %10 = vector.load %arg3[%c0_14, %c0_15] : memref<32x64xf32, #tpu.memory_space<vmem>>, vector<32x64xf32>
    %11 = vector.broadcast %9 : vector<32x1xf32> to vector<32x64xf32>
    %12 = vector.broadcast %7 : vector<1x64xf32> to vector<32x64xf32>
    %13 = arith.addf %11, %12 : vector<32x64xf32>
    %cst_16 = arith.constant 2.000000e-01 : f32
    %14 = vector.broadcast %cst_16 : f32 to vector<32x64xf32>
    %15 = arith.mulf %14, %13 : vector<32x64xf32>
    %16 = arith.maximumf %13, %15 : vector<32x64xf32>
    %17 = arith.addf %16, %10 : vector<32x64xf32>
    %cst_17 = arith.constant dense<0xFF800000> : vector<32xf32>
    %18 = vector.multi_reduction <maximumf>, %17, %cst_17 [1] : vector<32x64xf32> to vector<32xf32>
    %19 = vector.shape_cast %18 : vector<32xf32> to vector<32x1xf32>
    %20 = vector.broadcast %19 : vector<32x1xf32> to vector<32x64xf32>
    %21 = arith.subf %17, %20 : vector<32x64xf32>
    %22 = math.exp %21 : vector<32x64xf32>
    %cst_18 = arith.constant dense<0.000000e+00> : vector<32xf32>
    %23 = vector.multi_reduction <add>, %22, %cst_18 [1] : vector<32x64xf32> to vector<32xf32>
    %24 = vector.shape_cast %23 : vector<32xf32> to vector<32x1xf32>
    %cst_19 = arith.constant 9.99999968E-21 : f32
    %25 = vector.broadcast %cst_19 : f32 to vector<32x1xf32>
    %26 = arith.maximumf %24, %25 : vector<32x1xf32>
    %27 = arith.truncf %22 : vector<32x64xf32> to vector<32x64xbf16>
    %28 = arith.truncf %2 : vector<64x8xf32> to vector<64x8xbf16>
    %cst_20 = arith.constant dense<0.000000e+00> : vector<32x8xf32>
    %29 = tpu.matmul %27, %28, %cst_20 {dimension_numbers = #tpu.dot_dimension_numbers<[1], [0], [0], [1], [0, 0, 1, 1], [], []>} : vector<32x64xbf16>, vector<64x8xbf16>, vector<32x8xf32> -> vector<32x8xf32>
    %30 = tpu.reciprocal %26 {approx = true} : vector<32x1xf32> -> vector<32x1xf32>
    %31 = vector.broadcast %30 : vector<32x1xf32> to vector<32x8xf32>
    %32 = arith.mulf %29, %31 : vector<32x8xf32>
    %c0_21 = arith.constant 0 : index
    %c0_22 = arith.constant 0 : index
    %33 = vector.load %arg7[%c0_21, %c0_22] : memref<1x8xf32, #tpu.memory_space<vmem>>, vector<1x8xf32>
    %34 = vector.broadcast %33 : vector<1x8xf32> to vector<32x8xf32>
    %35 = arith.addf %32, %34 : vector<32x8xf32>
    %cst_23 = arith.constant dense<0xFF800000> : vector<32xf32>
    %36 = vector.multi_reduction <maximumf>, %35, %cst_23 [1] : vector<32x8xf32> to vector<32xf32>
    %37 = vector.shape_cast %36 : vector<32xf32> to vector<32x1xf32>
    %38 = vector.broadcast %37 : vector<32x1xf32> to vector<32x8xf32>
    %39 = arith.subf %35, %38 : vector<32x8xf32>
    %40 = math.exp %39 : vector<32x8xf32>
    %cst_24 = arith.constant dense<0.000000e+00> : vector<32xf32>
    %41 = vector.multi_reduction <add>, %40, %cst_24 [1] : vector<32x8xf32> to vector<32xf32>
    %42 = vector.shape_cast %41 : vector<32xf32> to vector<32x1xf32>
    %43 = math.log %42 : vector<32x1xf32>
    %44 = vector.broadcast %43 : vector<32x1xf32> to vector<32x8xf32>
    %45 = arith.subf %39, %44 : vector<32x8xf32>
    %c0_25 = arith.constant 0 : index
    %c0_26 = arith.constant 0 : index
    %46 = vector.load %arg8[%c0_25, %c0_26] : memref<32x16xf32, #tpu.memory_space<vmem>>, vector<32x8xf32>
    tpu.vector_store %arg8[%c0_25, %c0_26], %45 {strides = array<i32>} : memref<32x16xf32, #tpu.memory_space<vmem>>, vector<32x8xf32>,
    %c0_27 = arith.constant 0 : index
    %c8 = arith.constant 8 : index
    %47 = vector.load %arg8[%c0_27, %c8] : memref<32x16xf32, #tpu.memory_space<vmem>>, vector<32x8xf32>
    tpu.vector_store %arg8[%c0_27, %c8], %35 {strides = array<i32>} : memref<32x16xf32, #tpu.memory_space<vmem>>, vector<32x8xf32>,
    return
  }
  func.func @transform_0(%arg0: i32) -> (i32, i32) {
    %c0_i32 = arith.constant 0 : i32
    %c0_i32_0 = arith.constant 0 : i32
    %c0_i32_1 = arith.constant 0 : i32
    return %c0_i32, %c0_i32_0 : i32, i32
  }
  func.func @transform_1(%arg0: i32) -> (i32, i32) {
    %c0_i32 = arith.constant 0 : i32
    %c0_i32_0 = arith.constant 0 : i32
    return %arg0, %c0_i32 : i32, i32
  }
  func.func @transform_2(%arg0: i32) -> (i32, i32) {
    %c0_i32 = arith.constant 0 : i32
    %c0_i32_0 = arith.constant 0 : i32
    return %arg0, %c0_i32 : i32, i32
  }
  func.func @transform_3(%arg0: i32) -> (i32, i32) {
    %c0_i32 = arith.constant 0 : i32
    %c0_i32_0 = arith.constant 0 : i32
    %c0_i32_1 = arith.constant 0 : i32
    return %c0_i32, %c0_i32_0 : i32, i32
  }
  func.func @transform_4(%arg0: i32) -> (i32, i32) {
    %c0_i32 = arith.constant 0 : i32
    %c0_i32_0 = arith.constant 0 : i32
    %c0_i32_1 = arith.constant 0 : i32
    return %c0_i32, %c0_i32_0 : i32, i32
  }
  func.func @transform_5(%arg0: i32) -> (i32, i32) {
    %c0_i32 = arith.constant 0 : i32
    %c0_i32_0 = arith.constant 0 : i32
    %c0_i32_1 = arith.constant 0 : i32
    return %c0_i32, %c0_i32_0 : i32, i32
  }
  func.func @transform_6(%arg0: i32) -> (i32, i32) {
    %c0_i32 = arith.constant 0 : i32
    %c0_i32_0 = arith.constant 0 : i32
    %c0_i32_1 = arith.constant 0 : i32
    return %c0_i32, %c0_i32_0 : i32, i32
  }
  func.func @transform_7(%arg0: i32) -> (i32, i32) {
    %c0_i32 = arith.constant 0 : i32
    %c0_i32_0 = arith.constant 0 : i32
    return %arg0, %c0_i32 : i32, i32
  }
}

module attributes {stable_mosaic.version = 11 : i64} {
  func.func @_gat_layer0_kernel(%arg0: i32, %arg1: memref<64x16xbf16, #tpu.memory_space<vmem>>, %arg2: memref<32x16xbf16, #tpu.memory_space<vmem>>, %arg3: memref<32x64xf32, #tpu.memory_space<vmem>>, %arg4: memref<16x32xbf16, #tpu.memory_space<vmem>>, %arg5: memref<4x32xf32, #tpu.memory_space<vmem>>, %arg6: memref<32x4xf32, #tpu.memory_space<vmem>>, %arg7: memref<4x32xf32, #tpu.memory_space<vmem>>, %arg8: memref<1x32xf32, #tpu.memory_space<vmem>>, %arg9: memref<1x32xf32, #tpu.memory_space<vmem>>, %arg10: memref<32x32xbf16, #tpu.memory_space<vmem>>) attributes {dimension_semantics = [#tpu.dimension_semantics<parallel>], iteration_bounds = array<i64: 2>, scalar_prefetch = 0 : i64, scratch_operands = 0 : i64, tpu.core_type = #tpu.core_type<tc>, window_params = [{pipeline_mode = #tpu.pipeline_mode<synchronous>, transform_indices = @transform_0, window_bounds = array<i64: 64, 16>}, {transform_indices = @transform_1, window_bounds = array<i64: 32, 16>}, {transform_indices = @transform_2, window_bounds = array<i64: 32, 64>}, {pipeline_mode = #tpu.pipeline_mode<synchronous>, transform_indices = @transform_3, window_bounds = array<i64: 16, 32>}, {pipeline_mode = #tpu.pipeline_mode<synchronous>, transform_indices = @transform_4, window_bounds = array<i64: 4, 32>}, {pipeline_mode = #tpu.pipeline_mode<synchronous>, transform_indices = @transform_5, window_bounds = array<i64: 32, 4>}, {pipeline_mode = #tpu.pipeline_mode<synchronous>, transform_indices = @transform_6, window_bounds = array<i64: 4, 32>}, {pipeline_mode = #tpu.pipeline_mode<synchronous>, transform_indices = @transform_7, window_bounds = array<i64: 1, 32>}, {pipeline_mode = #tpu.pipeline_mode<synchronous>, transform_indices = @transform_8, window_bounds = array<i64: 1, 32>}, {transform_indices = @transform_9, window_bounds = array<i64: 32, 32>}]} {
    %c0 = arith.constant 0 : index
    %c0_0 = arith.constant 0 : index
    %0 = vector.load %arg1[%c0, %c0_0] : memref<64x16xbf16, #tpu.memory_space<vmem>>, vector<64x16xbf16>
    %c0_1 = arith.constant 0 : index
    %c0_2 = arith.constant 0 : index
    %1 = vector.load %arg4[%c0_1, %c0_2] : memref<16x32xbf16, #tpu.memory_space<vmem>>, vector<16x32xbf16>
    %cst = arith.constant dense<0.000000e+00> : vector<64x32xf32>
    %2 = tpu.matmul %0, %1, %cst {dimension_numbers = #tpu.dot_dimension_numbers<[1], [0], [0], [1], [0, 0, 1, 1], [], []>} : vector<64x16xbf16>, vector<16x32xbf16>, vector<64x32xf32> -> vector<64x32xf32>
    %c0_3 = arith.constant 0 : index
    %c0_4 = arith.constant 0 : index
    %3 = vector.load %arg2[%c0_3, %c0_4] : memref<32x16xbf16, #tpu.memory_space<vmem>>, vector<32x16xbf16>
    %c0_5 = arith.constant 0 : index
    %c0_6 = arith.constant 0 : index
    %4 = vector.load %arg4[%c0_5, %c0_6] : memref<16x32xbf16, #tpu.memory_space<vmem>>, vector<16x32xbf16>
    %cst_7 = arith.constant dense<0.000000e+00> : vector<32x32xf32>
    %5 = tpu.matmul %3, %4, %cst_7 {dimension_numbers = #tpu.dot_dimension_numbers<[1], [0], [0], [1], [0, 0, 1, 1], [], []>} : vector<32x16xbf16>, vector<16x32xbf16>, vector<32x32xf32> -> vector<32x32xf32>
    %c0_8 = arith.constant 0 : index
    %c0_9 = arith.constant 0 : index
    %6 = vector.load %arg5[%c0_8, %c0_9] : memref<4x32xf32, #tpu.memory_space<vmem>>, vector<4x32xf32>
    %cst_10 = arith.constant dense<0.000000e+00> : vector<4x64xf32>
    %7 = tpu.matmul %6, %2, %cst_10 {dimension_numbers = #tpu.dot_dimension_numbers<[1], [1], [0], [0], [0, 0, 1, 0], [], []>} : vector<4x32xf32>, vector<64x32xf32>, vector<4x64xf32> -> vector<4x64xf32>
    %c0_11 = arith.constant 0 : index
    %c0_12 = arith.constant 0 : index
    %8 = vector.load %arg6[%c0_11, %c0_12] : memref<32x4xf32, #tpu.memory_space<vmem>>, vector<32x4xf32>
    %cst_13 = arith.constant dense<0.000000e+00> : vector<32x4xf32>
    %9 = tpu.matmul %5, %8, %cst_13 {dimension_numbers = #tpu.dot_dimension_numbers<[1], [0], [0], [1], [0, 0, 1, 1], [], []>} : vector<32x32xf32>, vector<32x4xf32>, vector<32x4xf32> -> vector<32x4xf32>
    %c0_14 = arith.constant 0 : index
    %c0_15 = arith.constant 0 : index
    %10 = vector.load %arg3[%c0_14, %c0_15] : memref<32x64xf32, #tpu.memory_space<vmem>>, vector<32x64xf32>
    %c0_16 = arith.constant 0 : index
    %c0_17 = arith.constant 0 : index
    %11 = vector.load %arg7[%c0_16, %c0_17] : memref<4x32xf32, #tpu.memory_space<vmem>>, vector<4x32xf32>
    %12 = vector.extract_strided_slice %9 {offsets = [0, 0], sizes = [32, 1], strides = [1, 1]} : vector<32x4xf32> to vector<32x1xf32>
    %13 = vector.extract_strided_slice %7 {offsets = [0, 0], sizes = [1, 64], strides = [1, 1]} : vector<4x64xf32> to vector<1x64xf32>
    %14 = vector.broadcast %12 : vector<32x1xf32> to vector<32x64xf32>
    %15 = vector.broadcast %13 : vector<1x64xf32> to vector<32x64xf32>
    %16 = arith.addf %14, %15 : vector<32x64xf32>
    %cst_18 = arith.constant 2.000000e-01 : f32
    %17 = vector.broadcast %cst_18 : f32 to vector<32x64xf32>
    %18 = arith.mulf %17, %16 : vector<32x64xf32>
    %19 = arith.maximumf %16, %18 : vector<32x64xf32>
    %20 = arith.addf %19, %10 : vector<32x64xf32>
    %cst_19 = arith.constant dense<0xFF800000> : vector<32xf32>
    %21 = vector.multi_reduction <maximumf>, %20, %cst_19 [1] : vector<32x64xf32> to vector<32xf32>
    %22 = vector.shape_cast %21 : vector<32xf32> to vector<32x1xf32>
    %23 = vector.broadcast %22 : vector<32x1xf32> to vector<32x64xf32>
    %24 = arith.subf %20, %23 : vector<32x64xf32>
    %25 = math.exp %24 : vector<32x64xf32>
    %cst_20 = arith.constant dense<0.000000e+00> : vector<32xf32>
    %26 = vector.multi_reduction <add>, %25, %cst_20 [1] : vector<32x64xf32> to vector<32xf32>
    %27 = vector.shape_cast %26 : vector<32xf32> to vector<32x1xf32>
    %cst_21 = arith.constant 9.99999968E-21 : f32
    %28 = vector.broadcast %cst_21 : f32 to vector<32x1xf32>
    %29 = arith.maximumf %27, %28 : vector<32x1xf32>
    %30 = vector.extract_strided_slice %11 {offsets = [0, 0], sizes = [1, 32], strides = [1, 1]} : vector<4x32xf32> to vector<1x32xf32>
    %31 = vector.broadcast %30 : vector<1x32xf32> to vector<64x32xf32>
    %32 = arith.mulf %2, %31 : vector<64x32xf32>
    %33 = arith.truncf %25 : vector<32x64xf32> to vector<32x64xbf16>
    %34 = arith.truncf %32 : vector<64x32xf32> to vector<64x32xbf16>
    %cst_22 = arith.constant dense<0.000000e+00> : vector<32x32xf32>
    %35 = tpu.matmul %33, %34, %cst_22 {dimension_numbers = #tpu.dot_dimension_numbers<[1], [0], [0], [1], [0, 0, 1, 1], [], []>} : vector<32x64xbf16>, vector<64x32xbf16>, vector<32x32xf32> -> vector<32x32xf32>
    %36 = tpu.reciprocal %29 {approx = true} : vector<32x1xf32> -> vector<32x1xf32>
    %37 = vector.broadcast %36 : vector<32x1xf32> to vector<32x32xf32>
    %38 = arith.mulf %35, %37 : vector<32x32xf32>
    %39 = vector.extract_strided_slice %9 {offsets = [0, 1], sizes = [32, 1], strides = [1, 1]} : vector<32x4xf32> to vector<32x1xf32>
    %40 = vector.extract_strided_slice %7 {offsets = [1, 0], sizes = [1, 64], strides = [1, 1]} : vector<4x64xf32> to vector<1x64xf32>
    %41 = vector.broadcast %39 : vector<32x1xf32> to vector<32x64xf32>
    %42 = vector.broadcast %40 : vector<1x64xf32> to vector<32x64xf32>
    %43 = arith.addf %41, %42 : vector<32x64xf32>
    %cst_23 = arith.constant 2.000000e-01 : f32
    %44 = vector.broadcast %cst_23 : f32 to vector<32x64xf32>
    %45 = arith.mulf %44, %43 : vector<32x64xf32>
    %46 = arith.maximumf %43, %45 : vector<32x64xf32>
    %47 = arith.addf %46, %10 : vector<32x64xf32>
    %cst_24 = arith.constant dense<0xFF800000> : vector<32xf32>
    %48 = vector.multi_reduction <maximumf>, %47, %cst_24 [1] : vector<32x64xf32> to vector<32xf32>
    %49 = vector.shape_cast %48 : vector<32xf32> to vector<32x1xf32>
    %50 = vector.broadcast %49 : vector<32x1xf32> to vector<32x64xf32>
    %51 = arith.subf %47, %50 : vector<32x64xf32>
    %52 = math.exp %51 : vector<32x64xf32>
    %cst_25 = arith.constant dense<0.000000e+00> : vector<32xf32>
    %53 = vector.multi_reduction <add>, %52, %cst_25 [1] : vector<32x64xf32> to vector<32xf32>
    %54 = vector.shape_cast %53 : vector<32xf32> to vector<32x1xf32>
    %cst_26 = arith.constant 9.99999968E-21 : f32
    %55 = vector.broadcast %cst_26 : f32 to vector<32x1xf32>
    %56 = arith.maximumf %54, %55 : vector<32x1xf32>
    %57 = vector.extract_strided_slice %11 {offsets = [1, 0], sizes = [1, 32], strides = [1, 1]} : vector<4x32xf32> to vector<1x32xf32>
    %58 = vector.broadcast %57 : vector<1x32xf32> to vector<64x32xf32>
    %59 = arith.mulf %2, %58 : vector<64x32xf32>
    %60 = arith.truncf %52 : vector<32x64xf32> to vector<32x64xbf16>
    %61 = arith.truncf %59 : vector<64x32xf32> to vector<64x32xbf16>
    %cst_27 = arith.constant dense<0.000000e+00> : vector<32x32xf32>
    %62 = tpu.matmul %60, %61, %cst_27 {dimension_numbers = #tpu.dot_dimension_numbers<[1], [0], [0], [1], [0, 0, 1, 1], [], []>} : vector<32x64xbf16>, vector<64x32xbf16>, vector<32x32xf32> -> vector<32x32xf32>
    %63 = tpu.reciprocal %56 {approx = true} : vector<32x1xf32> -> vector<32x1xf32>
    %64 = vector.broadcast %63 : vector<32x1xf32> to vector<32x32xf32>
    %65 = arith.mulf %62, %64 : vector<32x32xf32>
    %66 = arith.addf %38, %65 : vector<32x32xf32>
    %67 = vector.extract_strided_slice %9 {offsets = [0, 2], sizes = [32, 1], strides = [1, 1]} : vector<32x4xf32> to vector<32x1xf32>
    %68 = vector.extract_strided_slice %7 {offsets = [2, 0], sizes = [1, 64], strides = [1, 1]} : vector<4x64xf32> to vector<1x64xf32>
    %69 = vector.broadcast %67 : vector<32x1xf32> to vector<32x64xf32>
    %70 = vector.broadcast %68 : vector<1x64xf32> to vector<32x64xf32>
    %71 = arith.addf %69, %70 : vector<32x64xf32>
    %cst_28 = arith.constant 2.000000e-01 : f32
    %72 = vector.broadcast %cst_28 : f32 to vector<32x64xf32>
    %73 = arith.mulf %72, %71 : vector<32x64xf32>
    %74 = arith.maximumf %71, %73 : vector<32x64xf32>
    %75 = arith.addf %74, %10 : vector<32x64xf32>
    %cst_29 = arith.constant dense<0xFF800000> : vector<32xf32>
    %76 = vector.multi_reduction <maximumf>, %75, %cst_29 [1] : vector<32x64xf32> to vector<32xf32>
    %77 = vector.shape_cast %76 : vector<32xf32> to vector<32x1xf32>
    %78 = vector.broadcast %77 : vector<32x1xf32> to vector<32x64xf32>
    %79 = arith.subf %75, %78 : vector<32x64xf32>
    %80 = math.exp %79 : vector<32x64xf32>
    %cst_30 = arith.constant dense<0.000000e+00> : vector<32xf32>
    %81 = vector.multi_reduction <add>, %80, %cst_30 [1] : vector<32x64xf32> to vector<32xf32>
    %82 = vector.shape_cast %81 : vector<32xf32> to vector<32x1xf32>
    %cst_31 = arith.constant 9.99999968E-21 : f32
    %83 = vector.broadcast %cst_31 : f32 to vector<32x1xf32>
    %84 = arith.maximumf %82, %83 : vector<32x1xf32>
    %85 = vector.extract_strided_slice %11 {offsets = [2, 0], sizes = [1, 32], strides = [1, 1]} : vector<4x32xf32> to vector<1x32xf32>
    %86 = vector.broadcast %85 : vector<1x32xf32> to vector<64x32xf32>
    %87 = arith.mulf %2, %86 : vector<64x32xf32>
    %88 = arith.truncf %80 : vector<32x64xf32> to vector<32x64xbf16>
    %89 = arith.truncf %87 : vector<64x32xf32> to vector<64x32xbf16>
    %cst_32 = arith.constant dense<0.000000e+00> : vector<32x32xf32>
    %90 = tpu.matmul %88, %89, %cst_32 {dimension_numbers = #tpu.dot_dimension_numbers<[1], [0], [0], [1], [0, 0, 1, 1], [], []>} : vector<32x64xbf16>, vector<64x32xbf16>, vector<32x32xf32> -> vector<32x32xf32>
    %91 = tpu.reciprocal %84 {approx = true} : vector<32x1xf32> -> vector<32x1xf32>
    %92 = vector.broadcast %91 : vector<32x1xf32> to vector<32x32xf32>
    %93 = arith.mulf %90, %92 : vector<32x32xf32>
    %94 = arith.addf %66, %93 : vector<32x32xf32>
    %95 = vector.extract_strided_slice %9 {offsets = [0, 3], sizes = [32, 1], strides = [1, 1]} : vector<32x4xf32> to vector<32x1xf32>
    %96 = vector.extract_strided_slice %7 {offsets = [3, 0], sizes = [1, 64], strides = [1, 1]} : vector<4x64xf32> to vector<1x64xf32>
    %97 = vector.broadcast %95 : vector<32x1xf32> to vector<32x64xf32>
    %98 = vector.broadcast %96 : vector<1x64xf32> to vector<32x64xf32>
    %99 = arith.addf %97, %98 : vector<32x64xf32>
    %cst_33 = arith.constant 2.000000e-01 : f32
    %100 = vector.broadcast %cst_33 : f32 to vector<32x64xf32>
    %101 = arith.mulf %100, %99 : vector<32x64xf32>
    %102 = arith.maximumf %99, %101 : vector<32x64xf32>
    %103 = arith.addf %102, %10 : vector<32x64xf32>
    %cst_34 = arith.constant dense<0xFF800000> : vector<32xf32>
    %104 = vector.multi_reduction <maximumf>, %103, %cst_34 [1] : vector<32x64xf32> to vector<32xf32>
    %105 = vector.shape_cast %104 : vector<32xf32> to vector<32x1xf32>
    %106 = vector.broadcast %105 : vector<32x1xf32> to vector<32x64xf32>
    %107 = arith.subf %103, %106 : vector<32x64xf32>
    %108 = math.exp %107 : vector<32x64xf32>
    %cst_35 = arith.constant dense<0.000000e+00> : vector<32xf32>
    %109 = vector.multi_reduction <add>, %108, %cst_35 [1] : vector<32x64xf32> to vector<32xf32>
    %110 = vector.shape_cast %109 : vector<32xf32> to vector<32x1xf32>
    %cst_36 = arith.constant 9.99999968E-21 : f32
    %111 = vector.broadcast %cst_36 : f32 to vector<32x1xf32>
    %112 = arith.maximumf %110, %111 : vector<32x1xf32>
    %113 = vector.extract_strided_slice %11 {offsets = [3, 0], sizes = [1, 32], strides = [1, 1]} : vector<4x32xf32> to vector<1x32xf32>
    %114 = vector.broadcast %113 : vector<1x32xf32> to vector<64x32xf32>
    %115 = arith.mulf %2, %114 : vector<64x32xf32>
    %116 = arith.truncf %108 : vector<32x64xf32> to vector<32x64xbf16>
    %117 = arith.truncf %115 : vector<64x32xf32> to vector<64x32xbf16>
    %cst_37 = arith.constant dense<0.000000e+00> : vector<32x32xf32>
    %118 = tpu.matmul %116, %117, %cst_37 {dimension_numbers = #tpu.dot_dimension_numbers<[1], [0], [0], [1], [0, 0, 1, 1], [], []>} : vector<32x64xbf16>, vector<64x32xbf16>, vector<32x32xf32> -> vector<32x32xf32>
    %119 = tpu.reciprocal %112 {approx = true} : vector<32x1xf32> -> vector<32x1xf32>
    %120 = vector.broadcast %119 : vector<32x1xf32> to vector<32x32xf32>
    %121 = arith.mulf %118, %120 : vector<32x32xf32>
    %122 = arith.addf %94, %121 : vector<32x32xf32>
    %c0_38 = arith.constant 0 : index
    %c0_39 = arith.constant 0 : index
    %123 = vector.load %arg8[%c0_38, %c0_39] : memref<1x32xf32, #tpu.memory_space<vmem>>, vector<1x32xf32>
    %124 = vector.broadcast %123 : vector<1x32xf32> to vector<32x32xf32>
    %125 = arith.mulf %122, %124 : vector<32x32xf32>
    %c0_40 = arith.constant 0 : index
    %c0_41 = arith.constant 0 : index
    %126 = vector.load %arg9[%c0_40, %c0_41] : memref<1x32xf32, #tpu.memory_space<vmem>>, vector<1x32xf32>
    %127 = vector.broadcast %126 : vector<1x32xf32> to vector<32x32xf32>
    %128 = arith.addf %125, %127 : vector<32x32xf32>
    %cst_42 = arith.constant 0.000000e+00 : f32
    %129 = vector.broadcast %cst_42 : f32 to vector<32x32xf32>
    %130 = arith.maximumf %128, %129 : vector<32x32xf32>
    %131 = arith.truncf %130 : vector<32x32xf32> to vector<32x32xbf16>
    %c0_43 = arith.constant 0 : index
    %c0_44 = arith.constant 0 : index
    %132 = vector.load %arg10[%c0_43, %c0_44] : memref<32x32xbf16, #tpu.memory_space<vmem>>, vector<32x32xbf16>
    tpu.vector_store %arg10[%c0_43, %c0_44], %131 {strides = array<i32>} : memref<32x32xbf16, #tpu.memory_space<vmem>>, vector<32x32xbf16>,
    return
  }
  func.func @transform_0(%arg0: i32) -> (i32, i32) {
    %c0_i32 = arith.constant 0 : i32
    %c0_i32_0 = arith.constant 0 : i32
    %c0_i32_1 = arith.constant 0 : i32
    return %c0_i32, %c0_i32_0 : i32, i32
  }
  func.func @transform_1(%arg0: i32) -> (i32, i32) {
    %c0_i32 = arith.constant 0 : i32
    %c0_i32_0 = arith.constant 0 : i32
    return %arg0, %c0_i32 : i32, i32
  }
  func.func @transform_2(%arg0: i32) -> (i32, i32) {
    %c0_i32 = arith.constant 0 : i32
    %c0_i32_0 = arith.constant 0 : i32
    return %arg0, %c0_i32 : i32, i32
  }
  func.func @transform_3(%arg0: i32) -> (i32, i32) {
    %c0_i32 = arith.constant 0 : i32
    %c0_i32_0 = arith.constant 0 : i32
    %c0_i32_1 = arith.constant 0 : i32
    return %c0_i32, %c0_i32_0 : i32, i32
  }
  func.func @transform_4(%arg0: i32) -> (i32, i32) {
    %c0_i32 = arith.constant 0 : i32
    %c0_i32_0 = arith.constant 0 : i32
    %c0_i32_1 = arith.constant 0 : i32
    return %c0_i32, %c0_i32_0 : i32, i32
  }
  func.func @transform_5(%arg0: i32) -> (i32, i32) {
    %c0_i32 = arith.constant 0 : i32
    %c0_i32_0 = arith.constant 0 : i32
    %c0_i32_1 = arith.constant 0 : i32
    return %c0_i32, %c0_i32_0 : i32, i32
  }
  func.func @transform_6(%arg0: i32) -> (i32, i32) {
    %c0_i32 = arith.constant 0 : i32
    %c0_i32_0 = arith.constant 0 : i32
    %c0_i32_1 = arith.constant 0 : i32
    return %c0_i32, %c0_i32_0 : i32, i32
  }
  func.func @transform_7(%arg0: i32) -> (i32, i32) {
    %c0_i32 = arith.constant 0 : i32
    %c0_i32_0 = arith.constant 0 : i32
    %c0_i32_1 = arith.constant 0 : i32
    return %c0_i32, %c0_i32_0 : i32, i32
  }
  func.func @transform_8(%arg0: i32) -> (i32, i32) {
    %c0_i32 = arith.constant 0 : i32
    %c0_i32_0 = arith.constant 0 : i32
    %c0_i32_1 = arith.constant 0 : i32
    return %c0_i32, %c0_i32_0 : i32, i32
  }
  func.func @transform_9(%arg0: i32) -> (i32, i32) {
    %c0_i32 = arith.constant 0 : i32
    %c0_i32_0 = arith.constant 0 : i32
    return %arg0, %c0_i32 : i32, i32
  }
}

</mosaic_0001>

<llo_original>
// kernel: gat_forward.3
$region0: #{gat_forward.3}
  #allocation0 [shape = 'u32[]', space=smem, size = 0x4, offset = 0x4, fixed_abs, tag = 'smem constant byte address 0x4 - core index']
  #allocation1 [shape = 'u32[144,128]{1,0:T(1,128)}', space=vmem, size = 0x12000, scoped, tag = 'internal scratch']
  %s0 = inlined_call_operand.vmem [shape: bf16[64,32], index: 0, kind: input, shape index: {}, may-alias: {0,1}]
  %s1 = inlined_call_operand.vmem [shape: bf16[64,32], index: 1, kind: input, shape index: {}, may-alias: {0,1}]
  %s2 = inlined_call_operand.vmem [shape: f32[64,64], index: 2, kind: input, shape index: {}]
  %s3 = inlined_call_operand.vmem [shape: bf16[32,8], index: 3, kind: input, shape index: {}]
  %s4 = inlined_call_operand.vmem [shape: f32[1,8], index: 4, kind: input, shape index: {}]
  %s5 = inlined_call_operand.vmem [shape: f32[8,1], index: 5, kind: input, shape index: {}]
  %s6 = inlined_call_operand.vmem [shape: f32[1,8], index: 6, kind: input, shape index: {}]
  %s7 = inlined_call_operand.vmem [shape: f32[64,16], index: 7, kind: output, shape index: {}]
  %s8 = sld [smem:[#allocation0]]
  $region61: #{gat_forward.3} parent=0
    _
  %s10 = ssub.s32 1, %s8
  %s11 = scalar_select 0, %s10, %s8
  loop: start=0, step=1, limit=4
  $region2: #{gat_forward.3} parent=0 // loop_pre_header
    _
  $region3: #{gat_forward.3} parent=0 // loop_header
    %s13 = sphi 0, %s17
    %p14 = scmp.ge.s32.totalorder %s13, 4
    %s21 = sphi 0, %s21
    %s23 = sphi 0, %s21
    %s24 = sphi 0, %s23
    %s38 = sphi 0, %s24
    %s44 = sphi 0, %s46
    %s47 = sphi 0, %s44
    %s48 = sphi 0, %s47
    %s64 = sphi 0, %s48
    %s70 = sphi 0, %s72
    %s73 = sphi 0, %s70
    %s74 = sphi 0, %s73
    %s90 = sphi 0, %s74
    %s94 = sphi 0, %s94
    %s96 = sphi 0, %s94
    %s97 = sphi 0, %s96
    %s111 = sphi 0, %s97
    %s115 = sphi 0, %s115
    %s117 = sphi 0, %s115
    %s118 = sphi 0, %s117
    %s132 = sphi 0, %s118
    %s136 = sphi 0, %s136
    %s138 = sphi 0, %s136
    %s139 = sphi 0, %s138
    %s153 = sphi 0, %s139
    %s157 = sphi 0, %s157
    %s159 = sphi 0, %s157
    %s160 = sphi 0, %s159
    %s174 = sphi 0, %s160
    %s180 = sphi 0, %s182
    %s183 = sphi 0, %s180
    %s184 = sphi 0, %s183
    %s200 = sphi 0, %s184
  $region4: #{gat_forward.3} parent=0 // loop_header_branch
    %16 = sbr.rel (%p14) target = $region8
  $region5: #{gat_forward.3} parent=0 // loop_body
    %s18 = ssub.s32 %s13, 1
    %s19 = ssub.s32 %s13, 2
    %s20 = sadd.s32 %s13, 1
    %s22 = sadd.s32 %s21, 1
    %p25 = scmp.eq.s32.totalorder %s13, 1
    %p26 = scmp.ne.s32.totalorder %s21, %s23
    %p27 = scmp.eq.s32.totalorder %s13, 0
    %p28 = por %p26, %p27
    %p29 = scmp.ne.s32.totalorder %s21, %s23
    %p30 = scmp.eq.s32.totalorder %s18, 1
    %p31 = por %p29, %p30
    %p32 = scmp.ne.s32.totalorder %s23, %s24
    %p33 = scmp.eq.s32.totalorder %s18, 0
    %p34 = por %p32, %p33
    %p35 = scmp.ne.s32.totalorder %s23, %s24
    %p36 = scmp.eq.s32.totalorder %s19, 1
    %p37 = por %p35, %p36
    %p39 = scmp.ne.s32.totalorder %s24, %s38
    %p40 = scmp.eq.s32.totalorder %s19, 0
    %p41 = por %p39, %p40
    %s42 = ssub.s32 %s13, %s20
    %p43 = scmp.eq.s32.totalorder %s42, 0
    %s45 = sadd.s32 %s44, 1
    %s46 = scalar_select %p43, %s44, %s45
    %p49 = pneg %p43
    %p50 = scmp.eq.s32.totalorder %s13, 1
    %p51 = por %p49, %p50
    %p52 = scmp.ne.s32.totalorder %s44, %s47
    %p53 = scmp.eq.s32.totalorder %s13, 0
    %p54 = por %p52, %p53
    %p55 = scmp.ne.s32.totalorder %s44, %s47
    %p56 = scmp.eq.s32.totalorder %s18, 1
    %p57 = por %p55, %p56
    %p58 = scmp.ne.s32.totalorder %s47, %s48
    %p59 = scmp.eq.s32.totalorder %s18, 0
    %p60 = por %p58, %p59
    %p61 = scmp.ne.s32.totalorder %s47, %s48
    %p62 = scmp.eq.s32.totalorder %s19, 1
    %p63 = por %p61, %p62
    %p65 = scmp.ne.s32.totalorder %s48, %s64
    %p66 = scmp.eq.s32.totalorder %s19, 0
    %p67 = por %p65, %p66
    %s68 = ssub.s32 %s13, %s20
    %p69 = scmp.eq.s32.totalorder %s68, 0
    %s71 = sadd.s32 %s70, 1
    %s72 = scalar_select %p69, %s70, %s71
    %p75 = pneg %p69
    %p76 = scmp.eq.s32.totalorder %s13, 1
    %p77 = por %p75, %p76
    %p78 = scmp.ne.s32.totalorder %s70, %s73
    %p79 = scmp.eq.s32.totalorder %s13, 0
    %p80 = por %p78, %p79
    %p81 = scmp.ne.s32.totalorder %s70, %s73
    %p82 = scmp.eq.s32.totalorder %s18, 1
    %p83 = por %p81, %p82
    %p84 = scmp.ne.s32.totalorder %s73, %s74
    %p85 = scmp.eq.s32.totalorder %s18, 0
    %p86 = por %p84, %p85
    %p87 = scmp.ne.s32.totalorder %s73, %s74
    %p88 = scmp.eq.s32.totalorder %s19, 1
    %p89 = por %p87, %p88
    %p91 = scmp.ne.s32.totalorder %s74, %s90
    %p92 = scmp.eq.s32.totalorder %s19, 0
    %p93 = por %p91, %p92
    %s95 = sadd.s32 %s94, 1
    %p98 = scmp.eq.s32.totalorder %s13, 1
    %p99 = scmp.ne.s32.totalorder %s94, %s96
    %p100 = scmp.eq.s32.totalorder %s13, 0
    %p101 = por %p99, %p100
    %p102 = scmp.ne.s32.totalorder %s94, %s96
    %p103 = scmp.eq.s32.totalorder %s18, 1
    %p104 = por %p102, %p103
    %p105 = scmp.ne.s32.totalorder %s96, %s97
    %p106 = scmp.eq.s32.totalorder %s18, 0
    %p107 = por %p105, %p106
    %p108 = scmp.ne.s32.totalorder %s96, %s97
    %p109 = scmp.eq.s32.totalorder %s19, 1
    %p110 = por %p108, %p109
    %p112 = scmp.ne.s32.totalorder %s97, %s111
    %p113 = scmp.eq.s32.totalorder %s19, 0
    %p114 = por %p112, %p113
    %s116 = sadd.s32 %s115, 1
    %p119 = scmp.eq.s32.totalorder %s13, 1
    %p120 = scmp.ne.s32.totalorder %s115, %s117
    %p121 = scmp.eq.s32.totalorder %s13, 0
    %p122 = por %p120, %p121
    %p123 = scmp.ne.s32.totalorder %s115, %s117
    %p124 = scmp.eq.s32.totalorder %s18, 1
    %p125 = por %p123, %p124
    %p126 = scmp.ne.s32.totalorder %s117, %s118
    %p127 = scmp.eq.s32.totalorder %s18, 0
    %p128 = por %p126, %p127
    %p129 = scmp.ne.s32.totalorder %s117, %s118
    %p130 = scmp.eq.s32.totalorder %s19, 1
    %p131 = por %p129, %p130
    %p133 = scmp.ne.s32.totalorder %s118, %s132
    %p134 = scmp.eq.s32.totalorder %s19, 0
    %p135 = por %p133, %p134
    %s137 = sadd.s32 %s136, 1
    %p140 = scmp.eq.s32.totalorder %s13, 1
    %p141 = scmp.ne.s32.totalorder %s136, %s138
    %p142 = scmp.eq.s32.totalorder %s13, 0
    %p143 = por %p141, %p142
    %p144 = scmp.ne.s32.totalorder %s136, %s138
    %p145 = scmp.eq.s32.totalorder %s18, 1
    %p146 = por %p144, %p145
    %p147 = scmp.ne.s32.totalorder %s138, %s139
    %p148 = scmp.eq.s32.totalorder %s18, 0
    %p149 = por %p147, %p148
    %p150 = scmp.ne.s32.totalorder %s138, %s139
    %p151 = scmp.eq.s32.totalorder %s19, 1
    %p152 = por %p150, %p151
    %p154 = scmp.ne.s32.totalorder %s139, %s153
    %p155 = scmp.eq.s32.totalorder %s19, 0
    %p156 = por %p154, %p155
    %s158 = sadd.s32 %s157, 1
    %p161 = scmp.eq.s32.totalorder %s13, 1
    %p162 = scmp.ne.s32.totalorder %s157, %s159
    %p163 = scmp.eq.s32.totalorder %s13, 0
    %p164 = por %p162, %p163
    %p165 = scmp.ne.s32.totalorder %s157, %s159
    %p166 = scmp.eq.s32.totalorder %s18, 1
    %p167 = por %p165, %p166
    %p168 = scmp.ne.s32.totalorder %s159, %s160
    %p169 = scmp.eq.s32.totalorder %s18, 0
    %p170 = por %p168, %p169
    %p171 = scmp.ne.s32.totalorder %s159, %s160
    %p172 = scmp.eq.s32.totalorder %s19, 1
    %p173 = por %p171, %p172
    %p175 = scmp.ne.s32.totalorder %s160, %s174
    %p176 = scmp.eq.s32.totalorder %s19, 0
    %p177 = por %p175, %p176
    %s178 = ssub.s32 %s13, %s20
    %p179 = scmp.eq.s32.totalorder %s178, 0
    %s181 = sadd.s32 %s180, 1
    %s182 = scalar_select %p179, %s180, %s181
    %p185 = pneg %p179
    %p186 = scmp.eq.s32.totalorder %s13, 1
    %p187 = por %p185, %p186
    %p188 = scmp.ne.s32.totalorder %s180, %s183
    %p189 = scmp.eq.s32.totalorder %s13, 0
    %p190 = por %p188, %p189
    %p191 = scmp.ne.s32.totalorder %s180, %s183
    %p192 = scmp.eq.s32.totalorder %s18, 1
    %p193 = por %p191, %p192
    %p194 = scmp.ne.s32.totalorder %s183, %s184
    %p195 = scmp.eq.s32.totalorder %s18, 0
    %p196 = por %p194, %p195
    %p197 = scmp.ne.s32.totalorder %s183, %s184
    %p198 = scmp.eq.s32.totalorder %s19, 1
    %p199 = por %p197, %p198
    %p201 = scmp.ne.s32.totalorder %s184, %s200
    %p202 = scmp.eq.s32.totalorder %s19, 0
    %p203 = por %p201, %p202
    %p204 = scmp.le.s32.totalorder 1, %s13
    %p205 = scmp.lt.s32.totalorder %s13, 3
    %p206 = pnand %p204, %p205
    %p207 = pneg %p206
    // Predicated region
    $region9: #{gat_forward.3} parent=5 // pred_check
      _
    $region10: #{gat_forward.3} parent=5 // pred_check_branch
      %209 = sbr.rel (%p206) target = $region12
    $region11: #{gat_forward.3} parent=5 // pred_region
      %s210 = ssub.s32 %s13, 1
      // Predicated region
      $region13: #{gat_forward.3} parent=11 // pred_check
        %p211 = pneg %p34
      $region14: #{gat_forward.3} parent=11 // pred_check_branch
        %213 = sbr.rel (%p211) target = $region16
      $region15: #{gat_forward.3} parent=11 // pred_region
        _
      $region16: #{gat_forward.3} parent=11 // pred_fallthru
        _
      // Predicated region
      $region17: #{gat_forward.3} parent=11 // pred_check
        %p214 = pneg %p107
      $region18: #{gat_forward.3} parent=11 // pred_check_branch
        %216 = sbr.rel (%p214) target = $region20
      $region19: #{gat_forward.3} parent=11 // pred_region
        _
      $region20: #{gat_forward.3} parent=11 // pred_fallthru
        _
      // Predicated region
      $region21: #{gat_forward.3} parent=11 // pred_check
        %p217 = pneg %p128
      $region22: #{gat_forward.3} parent=11 // pred_check_branch
        %219 = sbr.rel (%p217) target = $region24
      $region23: #{gat_forward.3} parent=11 // pred_region
        _
      $region24: #{gat_forward.3} parent=11 // pred_fallthru
        _
      // Predicated region
      $region25: #{gat_forward.3} parent=11 // pred_check
        %p220 = pneg %p149
      $region26: #{gat_forward.3} parent=11 // pred_check_branch
        %222 = sbr.rel (%p220) target = $region28
      $region27: #{gat_forward.3} parent=11 // pred_region
        _
      $region28: #{gat_forward.3} parent=11 // pred_fallthru
        _
      // Predicated region
      $region29: #{gat_forward.3} parent=11 // pred_check
        %p223 = pneg %p170
      $region30: #{gat_forward.3} parent=11 // pred_check_branch
        %225 = sbr.rel (%p223) target = $region32
      $region31: #{gat_forward.3} parent=11 // pred_region
        _
      $region32: #{gat_forward.3} parent=11 // pred_fallthru
        _
    $region12: #{gat_forward.3} parent=5 // pred_fallthru
      _
    %p226 = scmp.lt.s32.totalorder %s13, 2
    // Predicated region
    $region33: #{gat_forward.3} parent=5 // pred_check
      %p227 = pneg %p226
    $region34: #{gat_forward.3} parent=5 // pred_check_branch
      %229 = sbr.rel (%p227) target = $region36
    $region35: #{gat_forward.3} parent=5 // pred_region
      // Predicated region
      $region37: #{gat_forward.3} parent=35 // pred_check
        %p230 = pneg %p54
      $region38: #{gat_forward.3} parent=35 // pred_check_branch
        %232 = sbr.rel (%p230) target = $region40
      $region39: #{gat_forward.3} parent=35 // pred_region
        %s233 = smul.u32 4, %s13
        %p234 = scmp.lt.s32.totalorder %s233, 7
        %s235 = scalar_select %p234, %s233, 7
        %s236 = smul.addr %s235, 4
        %s237 = scalar_lea.vmem %s1, %s236
        %s238 = smul.u32 4, %s13
      $region40: #{gat_forward.3} parent=35 // pred_fallthru
        _
      // Predicated region
      $region41: #{gat_forward.3} parent=35 // pred_check
        %p239 = pneg %p80
      $region42: #{gat_forward.3} parent=35 // pred_check_branch
        %241 = sbr.rel (%p239) target = $region44
      $region43: #{gat_forward.3} parent=35 // pred_region
        %s242 = smul.u32 4, %s13
        %p243 = scmp.lt.s32.totalorder %s242, 7
        %s244 = scalar_select %p243, %s242, 7
        %s245 = smul.addr %s244, 8
        %s246 = scalar_lea.vmem %s2, %s245
        %s247 = smul.u32 4, %s13
      $region44: #{gat_forward.3} parent=35 // pred_fallthru
        _
    $region36: #{gat_forward.3} parent=5 // pred_fallthru
      _
    %p248 = scmp.le.s32.totalorder 1, %s13
    %p249 = scmp.lt.s32.totalorder %s13, 3
    %p250 = pnand %p248, %p249
    %p251 = pneg %p250
    // Predicated region
    $region45: #{gat_forward.3} parent=5 // pred_check
      _
    $region46: #{gat_forward.3} parent=5 // pred_check_branch
      %253 = sbr.rel (%p250) target = $region48
    $region47: #{gat_forward.3} parent=5 // pred_region
      %s254 = ssub.s32 %s13, 1
      %p255 = pneg %p34
      %p256 = pneg %p31
      %s257 = smul.u32 4, %s18
      %p258 = scmp.lt.s32.totalorder %s257, 7
      %s259 = scalar_select %p258, %s257, 7
      %s260 = smul.addr %s259, 4
      %s261 = scalar_lea.vmem %s1, %s260
      %p262 = pneg %p60
      %p263 = pneg %p57
      %s264 = smul.u32 4, %s18
      %p265 = scmp.lt.s32.totalorder %s264, 7
      %s266 = scalar_select %p265, %s264, 7
      %s267 = smul.addr %s266, 8
      %s268 = scalar_lea.vmem %s2, %s267
      %p269 = pneg %p86
      %p270 = pneg %p83
      %p271 = pneg %p107
      %p272 = pneg %p104
      %p273 = pneg %p128
      %p274 = pneg %p125
      %p275 = pneg %p149
      %p276 = pneg %p146
      %p277 = pneg %p170
      %p278 = pneg %p167
      %p279 = pneg %p196
      %p280 = pneg %p193
      %s281 = smul.u32 4, %s18
      %p282 = scmp.lt.s32.totalorder %s281, 7
      %s283 = scalar_select %p282, %s281, 7
      %s284 = smul.addr %s283, 8
      %s285 = scalar_lea.vmem %s7, %s284
      %s286 = smul.u32 4, %s18
      %p287 = scmp.lt.s32.totalorder %s286, 7
      %s288 = scalar_select %p287, %s286, 7
      %s289 = smul.addr %s288, 4
      %s290 = scalar_lea.vmem %s1, %s289
      %s291 = smul.u32 4, %s18
      %s292 = smul.u32 4, %s18
      %p293 = scmp.lt.s32.totalorder %s292, 7
      %s294 = scalar_select %p293, %s292, 7
      %s295 = smul.addr %s294, 8
      %s296 = scalar_lea.vmem %s2, %s295
      %s297 = smul.u32 4, %s18
      %s298 = smul.u32 4, %s18
      %p299 = scmp.lt.s32.totalorder %s298, 7
      %s300 = scalar_select %p299, %s298, 7
      %s301 = smul.addr %s300, 8
      %s302 = scalar_lea.vmem %s7, %s301
      %s303 = smul.u32 4, %s18
      %v305 = vld [vmem:[%s0] sm:$0xf]
      %v306 = vld [vmem:[%s0 + $0x4] sm:$0xf]
      %v307 = vld [vmem:[%s0 + $0x8] sm:$0xf]
      %v308 = vld [vmem:[%s0 + $0xc] sm:$0xf]
      %v309 = vld [vmem:[%s0 + $0x10] sm:$0xf]
      %v310 = vld [vmem:[%s0 + $0x14] sm:$0xf]
      %v311 = vld [vmem:[%s0 + $0x18] sm:$0xf]
      %v312 = vld [vmem:[%s0 + $0x1c] sm:$0xf]
      %v313 = vld [vmem:[%s3] sm:$0xf]
      %v314 = vld [vmem:[%s3 + $0x4] sm:$0xf]
      %v315 = vld [vmem:[%s3 + $0x8] sm:$0xf]
      %v316 = vld [vmem:[%s3 + $0xc] sm:$0xf]
      %v325 = vunpack.c.l.b16 %v305
      %v326 = vunpack.c.l.b16 %v306
      %v327 = vunpack.c.l.b16 %v307
      %v328 = vunpack.c.l.b16 %v308
      %v329 = vunpack.c.l.b16 %v309
      %v330 = vunpack.c.l.b16 %v310
      %v331 = vunpack.c.l.b16 %v311
      %v332 = vunpack.c.l.b16 %v312
      %v333 = vpack.c.b16 %v326, %v325
      %v334 = vpack.c.b16 %v328, %v327
      %v335 = vpack.c.b16 %v330, %v329
      %v336 = vpack.c.b16 %v332, %v331
      %v341 = vunpack.c.l.b16 %v313
      %v342 = vunpack.c.l.b16 %v314
      %v343 = vunpack.c.l.b16 %v315
      %v344 = vunpack.c.l.b16 %v316
      %v345 = vpack.c.b16 %v342, %v341
      %v346 = vpack.c.b16 %v344, %v343
      %vm349 = vcmask 261120
      %v351 = vsel %vm349, %v333, 0
      %v354 = vsel %vm349, %v334, 0
      %v357 = vsel %vm349, %v335, 0
      %v360 = vsel %vm349, %v336, 0
      %362 = vmatprep.subr.bf16.mxu0 0
      %363 = vmatpush1.bf16.msra.mxu0 %v345
      %364 = vmatprep.subr.bf16.mxu0 0
      %365 = vmatpush1.bf16.msra.mxu0 %v346
      %366 = vmatprep.subr.bf16.mxu0 0
      %367 = vmatpush1.bf16.msra.mxu0 0
      %368 = vmatprep.subr.bf16.mxu0 0
      %369 = vmatpush1.bf16.msra.mxu0 0
      %370 = vmatprep.subr.bf16.mxu0 0
      %371 = vmatpush1.bf16.msra.mxu0 0
      %372 = vmatprep.subr.bf16.mxu0 0
      %373 = vmatpush1.bf16.msra.mxu0 0
      %374 = vmatprep.subr.bf16.mxu0 0
      %375 = vmatpush1.bf16.msra.mxu0 0
      %376 = vmatprep.subr.bf16.mxu0 0
      %377 = vmatpush1.bf16.msra.mxu0 0
      %378 = vmatprep.subr.bf16.mxu0 0
      %379 = vmatpush1.bf16.msra.mxu0 0
      %380 = vmatprep.subr.bf16.mxu0 0
      %381 = vmatpush1.bf16.msra.mxu0 0
      %382 = vmatprep.subr.bf16.mxu0 0
      %383 = vmatpush1.bf16.msra.mxu0 0
      %384 = vmatprep.subr.bf16.mxu0 0
      %385 = vmatpush1.bf16.msra.mxu0 0
      %386 = vmatprep.subr.bf16.mxu0 0
      %387 = vmatpush1.bf16.msra.mxu0 0
      %388 = vmatprep.subr.bf16.mxu0 0
      %389 = vmatpush1.bf16.msra.mxu0 0
      %390 = vmatprep.subr.bf16.mxu0 0
      %391 = vmatpush1.bf16.msra.mxu0 0
      %392 = vmatprep.subr.bf16.mxu0 0
      %393 = vmatpush1.bf16.msra.mxu0 0
      %394 = vmatprep.mubr.bf16.mxu0 0
      %395 = vmatmul.mubr.bf16.gmra.mrb[0].mxu0 %v351
      %v396 = vpop.f32.mrb[0].mxu0
      %v397 = vadd.f32 0.0, %v396
      %v398 = vpop.f32.mrb[0].mxu0
      %v399 = vpop.f32.mrb[0].mxu0
      %v400 = vadd.f32 0.0, %v399
      %v401 = vpop.f32.mrb[0].mxu0
      %402 = vmatprep.mubr.bf16.mxu0 0
      %403 = vmatmul.mubr.bf16.gmra.mrb[0].mxu0 %v354
      %v404 = vpop.f32.mrb[0].mxu0
      %v405 = vadd.f32 0.0, %v404
      %v406 = vpop.f32.mrb[0].mxu0
      %v407 = vpop.f32.mrb[0].mxu0
      %v408 = vadd.f32 0.0, %v407
      %v409 = vpop.f32.mrb[0].mxu0
      %410 = vmatprep.mubr.bf16.mxu0 0
      %411 = vmatmul.mubr.bf16.gmra.mrb[0].mxu0 %v357
      %v412 = vpop.f32.mrb[0].mxu0
      %v413 = vadd.f32 0.0, %v412
      %v414 = vpop.f32.mrb[0].mxu0
      %v415 = vpop.f32.mrb[0].mxu0
      %v416 = vadd.f32 0.0, %v415
      %v417 = vpop.f32.mrb[0].mxu0
      %418 = vmatprep.mubr.bf16.mxu0 0
      %419 = vmatmul.mubr.bf16.gmra.mrb[0].mxu0 %v360
      %v420 = vpop.f32.mrb[0].mxu0
      %v421 = vadd.f32 0.0, %v420
      %v422 = vpop.f32.mrb[0].mxu0
      %v423 = vpop.f32.mrb[0].mxu0
      %v424 = vadd.f32 0.0, %v423
      %v425 = vpop.f32.mrb[0].mxu0
      %426 = vdwg.mxu0
      %v427 = vld [vmem:[%s290] sm:$0xf]
      %v428 = vld [vmem:[%s290 + $0x4] sm:$0xf]
      %v429 = vld [vmem:[%s290 + $0x8] sm:$0xf]
      %v430 = vld [vmem:[%s290 + $0xc] sm:$0xf]
      %v435 = vunpack.c.l.b16 %v427
      %v436 = vunpack.c.l.b16 %v428
      %v437 = vunpack.c.l.b16 %v429
      %v438 = vunpack.c.l.b16 %v430
      %v439 = vpack.c.b16 %v436, %v435
      %v440 = vpack.c.b16 %v438, %v437
      %v442 = vsel %vm349, %v439, 0
      %v445 = vsel %vm349, %v440, 0
      %447 = vmatprep.subr.bf16.mxu0 0
      %448 = vmatpush1.bf16.msra.mxu0 %v345
      %449 = vmatprep.subr.bf16.mxu0 0
      %450 = vmatpush1.bf16.msra.mxu0 %v346
      %451 = vmatprep.subr.bf16.mxu0 0
      %452 = vmatpush1.bf16.msra.mxu0 0
      %453 = vmatprep.subr.bf16.mxu0 0
      %454 = vmatpush1.bf16.msra.mxu0 0
      %455 = vmatprep.subr.bf16.mxu0 0
      %456 = vmatpush1.bf16.msra.mxu0 0
      %457 = vmatprep.subr.bf16.mxu0 0
      %458 = vmatpush1.bf16.msra.mxu0 0
      %459 = vmatprep.subr.bf16.mxu0 0
      %460 = vmatpush1.bf16.msra.mxu0 0
      %461 = vmatprep.subr.bf16.mxu0 0
      %462 = vmatpush1.bf16.msra.mxu0 0
      %463 = vmatprep.subr.bf16.mxu0 0
      %464 = vmatpush1.bf16.msra.mxu0 0
      %465 = vmatprep.subr.bf16.mxu0 0
      %466 = vmatpush1.bf16.msra.mxu0 0
      %467 = vmatprep.subr.bf16.mxu0 0
      %468 = vmatpush1.bf16.msra.mxu0 0
      %469 = vmatprep.subr.bf16.mxu0 0
      %470 = vmatpush1.bf16.msra.mxu0 0
      %471 = vmatprep.subr.bf16.mxu0 0
      %472 = vmatpush1.bf16.msra.mxu0 0
      %473 = vmatprep.subr.bf16.mxu0 0
      %474 = vmatpush1.bf16.msra.mxu0 0
      %475 = vmatprep.subr.bf16.mxu0 0
      %476 = vmatpush1.bf16.msra.mxu0 0
      %477 = vmatprep.subr.bf16.mxu0 0
      %478 = vmatpush1.bf16.msra.mxu0 0
      %479 = vmatprep.mubr.bf16.mxu0 0
      %480 = vmatmul.mubr.bf16.gmra.mrb[0].mxu0 %v442
      %v481 = vpop.f32.mrb[0].mxu0
      %v482 = vadd.f32 0.0, %v481
      %v483 = vpop.f32.mrb[0].mxu0
      %v484 = vpop.f32.mrb[0].mxu0
      %v485 = vadd.f32 0.0, %v484
      %v486 = vpop.f32.mrb[0].mxu0
      %487 = vmatprep.mubr.bf16.mxu0 0
      %488 = vmatmul.mubr.bf16.gmra.mrb[0].mxu0 %v445
      %v489 = vpop.f32.mrb[0].mxu0
      %v490 = vadd.f32 0.0, %v489
      %v491 = vpop.f32.mrb[0].mxu0
      %v492 = vpop.f32.mrb[0].mxu0
      %v493 = vadd.f32 0.0, %v492
      %v494 = vpop.f32.mrb[0].mxu0
      %495 = vdwg.mxu0
      %v496 = vld [vmem:[%s4] sm:$0x1]
      %vm497 = vcmask 64512
      %v499 = vsel %vm497, %v496, 0
      %v502 = vsel %vm497, %v397, 0
      %v505 = vsel %vm497, %v400, 0
      %v508 = vsel %vm497, %v405, 0
      %v511 = vsel %vm497, %v408, 0
      %v514 = vsel %vm497, %v413, 0
      %v517 = vsel %vm497, %v416, 0
      %v520 = vsel %vm497, %v421, 0
      %v523 = vsel %vm497, %v424, 0
      %525 = vmatprep.subr.mxu0 0.0
      %526 = vmatpush1.xpose.msra.mxu0 %v502
      %527 = vmatprep.subr.mxu0 0.0
      %528 = vmatpush1.xpose.msra.mxu0 %v505
      %529 = vmatprep.subr.mxu0 0.0
      %530 = vmatpush1.xpose.msra.mxu0 %v508
      %531 = vmatprep.subr.mxu0 0.0
      %532 = vmatpush1.xpose.msra.mxu0 %v511
      %533 = vmatprep.subr.mxu0 0.0
      %534 = vmatpush1.xpose.msra.mxu0 %v514
      %535 = vmatprep.subr.mxu0 0.0
      %536 = vmatpush1.xpose.msra.mxu0 %v517
      %537 = vmatprep.subr.mxu0 0.0
      %538 = vmatpush1.xpose.msra.mxu0 %v520
      %539 = vmatprep.subr.mxu0 0.0
      %540 = vmatpush1.xpose.msra.mxu0 %v523
      %541 = vmatprep.subr.mxu0 0.0
      %542 = vmatpush1.xpose.msra.mxu0 0.0
      %543 = vmatprep.subr.mxu0 0.0
      %544 = vmatpush1.xpose.msra.mxu0 0.0
      %545 = vmatprep.subr.mxu0 0.0
      %546 = vmatpush1.xpose.msra.mxu0 0.0
      %547 = vmatprep.subr.mxu0 0.0
      %548 = vmatpush1.xpose.msra.mxu0 0.0
      %549 = vmatprep.subr.mxu0 0.0
      %550 = vmatpush1.xpose.msra.mxu0 0.0
      %551 = vmatprep.subr.mxu0 0.0
      %552 = vmatpush1.xpose.msra.mxu0 0.0
      %553 = vmatprep.subr.mxu0 0.0
      %554 = vmatpush1.xpose.msra.mxu0 0.0
      %555 = vmatprep.subr.mxu0 0.0
      %556 = vmatpush1.xpose.msra.mxu0 0.0
      %557 = vmatprep.subr.mxu0 0.0
      %558 = vmatpush1.xpose.msra.mxu0 0.0
      %559 = vmatprep.subr.mxu0 0.0
      %560 = vmatpush1.xpose.msra.mxu0 0.0
      %561 = vmatprep.subr.mxu0 0.0
      %562 = vmatpush1.xpose.msra.mxu0 0.0
      %563 = vmatprep.subr.mxu0 0.0
      %564 = vmatpush1.xpose.msra.mxu0 0.0
      %565 = vmatprep.subr.mxu0 0.0
      %566 = vmatpush1.xpose.msra.mxu0 0.0
      %567 = vmatprep.subr.mxu0 0.0
      %568 = vmatpush1.xpose.msra.mxu0 0.0
      %569 = vmatprep.subr.mxu0 0.0
      %570 = vmatpush1.xpose.msra.mxu0 0.0
      %571 = vmatprep.subr.mxu0 0.0
      %572 = vmatpush1.xpose.msra.mxu0 0.0
      %573 = vmatprep.subr.mxu0 0.0
      %574 = vmatpush1.xpose.msra.mxu0 0.0
      %575 = vmatprep.subr.mxu0 0.0
      %576 = vmatpush1.xpose.msra.mxu0 0.0
      %577 = vmatprep.subr.mxu0 0.0
      %578 = vmatpush1.xpose.msra.mxu0 0.0
      %579 = vmatprep.subr.mxu0 0.0
      %580 = vmatpush1.xpose.msra.mxu0 0.0
      %581 = vmatprep.subr.mxu0 0.0
      %582 = vmatpush1.xpose.msra.mxu0 0.0
      %583 = vmatprep.subr.mxu0 0.0
      %584 = vmatpush1.xpose.msra.mxu0 0.0
      %585 = vmatprep.subr.mxu0 0.0
      %586 = vmatpush1.xpose.msra.mxu0 0.0
      %587 = vmatprep.subr.mxu0 0.0
      %588 = vmatpush1.xpose.msra.mxu0 0.0
      %589 = vmatprep.mubr.f32.mxu0 0.0
      %590 = vmatmul.mubr.f32.gmra.mrb[0].mxu0 %v499
      %v591 = vpop.f32.mrb[0].mxu0
      %v592 = vadd.f32 0.0, %v591
      %v593 = vpop.f32.mrb[0].mxu0
      %594 = vdwg.mxu0
      %v595 = vld [vmem:[%s5] sm:$0xff]
      %v597 = vsel %vm497, %v482, 0
      %v600 = vsel %vm497, %v485, 0
      %v603 = vsel %vm497, %v490, 0
      %v606 = vsel %vm497, %v493, 0
      %608 = vmatprep.subr.mxu0 0.0
      %609 = vmatpush1.msra.mxu0 %v595
      %610 = vmatprep.subr.mxu0 0.0
      %611 = vmatpush1.msra.mxu0 0.0
      %612 = vmatprep.subr.mxu0 0.0
      %613 = vmatpush1.msra.mxu0 0.0
      %614 = vmatprep.subr.mxu0 0.0
      %615 = vmatpush1.msra.mxu0 0.0
      %616 = vmatprep.subr.mxu0 0.0
      %617 = vmatpush1.msra.mxu0 0.0
      %618 = vmatprep.subr.mxu0 0.0
      %619 = vmatpush1.msra.mxu0 0.0
      %620 = vmatprep.subr.mxu0 0.0
      %621 = vmatpush1.msra.mxu0 0.0
      %622 = vmatprep.subr.mxu0 0.0
      %623 = vmatpush1.msra.mxu0 0.0
      %624 = vmatprep.subr.mxu0 0.0
      %625 = vmatpush1.msra.mxu0 0.0
      %626 = vmatprep.subr.mxu0 0.0
      %627 = vmatpush1.msra.mxu0 0.0
      %628 = vmatprep.subr.mxu0 0.0
      %629 = vmatpush1.msra.mxu0 0.0
      %630 = vmatprep.subr.mxu0 0.0
      %631 = vmatpush1.msra.mxu0 0.0
      %632 = vmatprep.subr.mxu0 0.0
      %633 = vmatpush1.msra.mxu0 0.0
      %634 = vmatprep.subr.mxu0 0.0
      %635 = vmatpush1.msra.mxu0 0.0
      %636 = vmatprep.subr.mxu0 0.0
      %637 = vmatpush1.msra.mxu0 0.0
      %638 = vmatprep.subr.mxu0 0.0
      %639 = vmatpush1.msra.mxu0 0.0
      %640 = vmatprep.subr.mxu0 0.0
      %641 = vmatpush1.msra.mxu0 0.0
      %642 = vmatprep.subr.mxu0 0.0
      %643 = vmatpush1.msra.mxu0 0.0
      %644 = vmatprep.subr.mxu0 0.0
      %645 = vmatpush1.msra.mxu0 0.0
      %646 = vmatprep.subr.mxu0 0.0
      %647 = vmatpush1.msra.mxu0 0.0
      %648 = vmatprep.subr.mxu0 0.0
      %649 = vmatpush1.msra.mxu0 0.0
      %650 = vmatprep.subr.mxu0 0.0
      %651 = vmatpush1.msra.mxu0 0.0
      %652 = vmatprep.subr.mxu0 0.0
      %653 = vmatpush1.msra.mxu0 0.0
      %654 = vmatprep.subr.mxu0 0.0
      %655 = vmatpush1.msra.mxu0 0.0
      %656 = vmatprep.subr.mxu0 0.0
      %657 = vmatpush1.msra.mxu0 0.0
      %658 = vmatprep.subr.mxu0 0.0
      %659 = vmatpush1.msra.mxu0 0.0
      %660 = vmatprep.subr.mxu0 0.0
      %661 = vmatpush1.msra.mxu0 0.0
      %662 = vmatprep.subr.mxu0 0.0
      %663 = vmatpush1.msra.mxu0 0.0
      %664 = vmatprep.subr.mxu0 0.0
      %665 = vmatpush1.msra.mxu0 0.0
      %666 = vmatprep.subr.mxu0 0.0
      %667 = vmatpush1.msra.mxu0 0.0
      %668 = vmatprep.subr.mxu0 0.0
      %669 = vmatpush1.msra.mxu0 0.0
      %670 = vmatprep.subr.mxu0 0.0
      %671 = vmatpush1.msra.mxu0 0.0
      %672 = vmatprep.mubr.f32.mxu0 0.0
      %673 = vmatmul.mubr.f32.gmra.mrb[0].mxu0 %v597
      %v674 = vpop.f32.mrb[0].mxu0
      %v675 = vadd.f32 0.0, %v674
      %v676 = vpop.f32.mrb[0].mxu0
      %677 = vmatprep.mubr.f32.mxu0 0.0
      %678 = vmatmul.mubr.f32.gmra.mrb[0].mxu0 %v600
      %v679 = vpop.f32.mrb[0].mxu0
      %v680 = vadd.f32 0.0, %v679
      %v681 = vpop.f32.mrb[0].mxu0
      %682 = vmatprep.mubr.f32.mxu0 0.0
      %683 = vmatmul.mubr.f32.gmra.mrb[0].mxu0 %v603
      %v684 = vpop.f32.mrb[0].mxu0
      %v685 = vadd.f32 0.0, %v684
      %v686 = vpop.f32.mrb[0].mxu0
      %687 = vmatprep.mubr.f32.mxu0 0.0
      %688 = vmatmul.mubr.f32.gmra.mrb[0].mxu0 %v606
      %v689 = vpop.f32.mrb[0].mxu0
      %v690 = vadd.f32 0.0, %v689
      %v691 = vpop.f32.mrb[0].mxu0
      %692 = vdwg.mxu0
      %v693 = vld [vmem:[%s296] sm:$0xff]
      %v694 = vld [vmem:[%s296 + $0x8] sm:$0xff]
      %v695 = vld [vmem:[%s296 + $0x10] sm:$0xff]
      %v696 = vld [vmem:[%s296 + $0x18] sm:$0xff]
      %698 = vset.pattern.permute.xlu0 0
      %699 = vperm.xlu0 %698, %v675
      %v700 = vpop.permute.xlu0 %699
      %703 = vset.pattern.permute.xlu0 0
      %704 = vperm.xlu0 %703, %v680
      %v705 = vpop.permute.xlu0 %704
      %708 = vset.pattern.permute.xlu0 0
      %709 = vperm.xlu0 %708, %v685
      %v710 = vpop.permute.xlu0 %709
      %713 = vset.pattern.permute.xlu0 0
      %714 = vperm.xlu0 %713, %v690
      %v715 = vpop.permute.xlu0 %714
      %v717 = vlaneseq
      %v718 = vshrl.u32 %v717, 7
      %v719 = vsub.s32 0, %v718
      %v720 = vrot.slane %v592, %v719
      %v721 = vadd.f32 %v700, %v720
      %v722 = vadd.f32 %v705, %v720
      %v723 = vadd.f32 %v710, %v720
      %v724 = vadd.f32 %v715, %v720
      %v725 = vmul.f32 %v721, 0.2
      %v726 = vmul.f32 %v722, 0.2
      %v727 = vmul.f32 %v723, 0.2
      %v728 = vmul.f32 %v724, 0.2
      %v729 = vmax.f32 %v721, %v725
      %v730 = vmax.f32 %v722, %v726
      %v731 = vmax.f32 %v723, %v727
      %v732 = vmax.f32 %v724, %v728
      %v733 = vadd.f32 %v729, %v693
      %v734 = vadd.f32 %v730, %v694
      %v735 = vadd.f32 %v731, %v695
      %v736 = vadd.f32 %v732, %v696
      %vm737 = vcmask 523264
      %v738 = vsel %vm737, %v733, -inf
      %739 = vmax.xlane.f32.xlu0 %v738
      %v740 = vpop.xlane.xlu0 %739
      %v741 = vsel %vm737, %v734, -inf
      %742 = vmax.xlane.f32.xlu0 %v741
      %v743 = vpop.xlane.xlu0 %742
      %v744 = vsel %vm737, %v735, -inf
      %745 = vmax.xlane.f32.xlu0 %v744
      %v746 = vpop.xlane.xlu0 %745
      %v747 = vsel %vm737, %v736, -inf
      %748 = vmax.xlane.f32.xlu0 %v747
      %v749 = vpop.xlane.xlu0 %748
      %v750 = vsub.f32 %v733, %v740
      %v751 = vsub.f32 %v734, %v743
      %v752 = vsub.f32 %v735, %v746
      %v753 = vsub.f32 %v736, %v749
      %v754 = vmul.f32 %v750, 1.442695
      %v755 = vpow.pop %v754
      %v756 = vmul.f32 %v751, 1.442695
      %v757 = vpow.pop %v756
      %v758 = vmul.f32 %v752, 1.442695
      %v759 = vpow.pop %v758
      %v760 = vmul.f32 %v753, 1.442695
      %v761 = vpow.pop %v760
      %v762 = vsel %vm737, %v755, 0.0
      %763 = vadd.xlane.f32.xlu0 %v762
      %v764 = vpop.xlane.xlu0 %763
      %v765 = vsel %vm737, %v757, 0.0
      %766 = vadd.xlane.f32.xlu0 %v765
      %v767 = vpop.xlane.xlu0 %766
      %v768 = vsel %vm737, %v759, 0.0
      %769 = vadd.xlane.f32.xlu0 %v768
      %v770 = vpop.xlane.xlu0 %769
      %v771 = vsel %vm737, %v761, 0.0
      %772 = vadd.xlane.f32.xlu0 %v771
      %v773 = vpop.xlane.xlu0 %772
      %v774 = vmax.f32 %v764, 1e-20
      %v775 = vmax.f32 %v767, 1e-20
      %v776 = vmax.f32 %v770, 1e-20
      %v777 = vmax.f32 %v773, 1e-20
      %v778 = vpack.c.bf16 %v757, %v755
      %v779 = vpack.c.bf16 %v761, %v759
      %v780 = vpack.c.bf16 %v400, %v397
      %v781 = vpack.c.bf16 %v408, %v405
      %v782 = vpack.c.bf16 %v416, %v413
      %v783 = vpack.c.bf16 %v424, %v421
      %v785 = vsel %vm737, %v778, 0
      %v788 = vsel %vm737, %v779, 0
      %790 = vmatprep.subr.bf16.mxu0 0
      %791 = vmatpush1.bf16.msra.mxu0 %v780
      %792 = vmatprep.subr.bf16.mxu0 0
      %793 = vmatpush1.bf16.msra.mxu0 %v781
      %794 = vmatprep.subr.bf16.mxu0 0
      %795 = vmatpush1.bf16.msra.mxu0 %v782
      %796 = vmatprep.subr.bf16.mxu0 0
      %797 = vmatpush1.bf16.msra.mxu0 %v783
      %798 = vmatprep.subr.bf16.mxu0 0
      %799 = vmatpush1.bf16.msra.mxu0 0
      %800 = vmatprep.subr.bf16.mxu0 0
      %801 = vmatpush1.bf16.msra.mxu0 0
      %802 = vmatprep.subr.bf16.mxu0 0
      %803 = vmatpush1.bf16.msra.mxu0 0
      %804 = vmatprep.subr.bf16.mxu0 0
      %805 = vmatpush1.bf16.msra.mxu0 0
      %806 = vmatprep.subr.bf16.mxu0 0
      %807 = vmatpush1.bf16.msra.mxu0 0
      %808 = vmatprep.subr.bf16.mxu0 0
      %809 = vmatpush1.bf16.msra.mxu0 0
      %810 = vmatprep.subr.bf16.mxu0 0
      %811 = vmatpush1.bf16.msra.mxu0 0
      %812 = vmatprep.subr.bf16.mxu0 0
      %813 = vmatpush1.bf16.msra.mxu0 0
      %814 = vmatprep.subr.bf16.mxu0 0
      %815 = vmatpush1.bf16.msra.mxu0 0
      %816 = vmatprep.subr.bf16.mxu0 0
      %817 = vmatpush1.bf16.msra.mxu0 0
      %818 = vmatprep.subr.bf16.mxu0 0
      %819 = vmatpush1.bf16.msra.mxu0 0
      %820 = vmatprep.subr.bf16.mxu0 0
      %821 = vmatpush1.bf16.msra.mxu0 0
      %822 = vmatprep.mubr.bf16.mxu0 0
      %823 = vmatmul.mubr.bf16.gmra.mrb[0].mxu0 %v785
      %v824 = vpop.f32.mrb[0].mxu0
      %v825 = vadd.f32 0.0, %v824
      %v826 = vpop.f32.mrb[0].mxu0
      %v827 = vpop.f32.mrb[0].mxu0
      %v828 = vadd.f32 0.0, %v827
      %v829 = vpop.f32.mrb[0].mxu0
      %830 = vmatprep.mubr.bf16.mxu0 0
      %831 = vmatmul.mubr.bf16.gmra.mrb[0].mxu0 %v788
      %v832 = vpop.f32.mrb[0].mxu0
      %v833 = vadd.f32 0.0, %v832
      %v834 = vpop.f32.mrb[0].mxu0
      %v835 = vpop.f32.mrb[0].mxu0
      %v836 = vadd.f32 0.0, %v835
      %v837 = vpop.f32.mrb[0].mxu0
      %838 = vdwg.mxu0
      %v839 = vrcp.pop %v774
      %v840 = vrcp.pop %v775
      %v841 = vrcp.pop %v776
      %v842 = vrcp.pop %v777
      %v843 = vmul.f32 %v825, %v839
      %v844 = vmul.f32 %v828, %v840
      %v845 = vmul.f32 %v833, %v841
      %v846 = vmul.f32 %v836, %v842
      %v847 = vld [vmem:[%s6] sm:$0x1]
      %v849 = vlaneseq
      %v850 = vshrl.u32 %v849, 7
      %v851 = vsub.s32 0, %v850
      %v852 = vrot.slane %v847, %v851
      %v854 = vadd.f32 %v843, %v852
      %v855 = vadd.f32 %v844, %v852
      %v856 = vadd.f32 %v845, %v852
      %v857 = vadd.f32 %v846, %v852
      %v858 = vsel %vm497, %v854, -inf
      %859 = vmax.xlane.f32.xlu0 %v858
      %v860 = vpop.xlane.xlu0 %859
      %v861 = vsel %vm497, %v855, -inf
      %862 = vmax.xlane.f32.xlu0 %v861
      %v863 = vpop.xlane.xlu0 %862
      %v864 = vsel %vm497, %v856, -inf
      %865 = vmax.xlane.f32.xlu0 %v864
      %v866 = vpop.xlane.xlu0 %865
      %v867 = vsel %vm497, %v857, -inf
      %868 = vmax.xlane.f32.xlu0 %v867
      %v869 = vpop.xlane.xlu0 %868
      %v870 = vsub.f32 %v854, %v860
      %v871 = vsub.f32 %v855, %v863
      %v872 = vsub.f32 %v856, %v866
      %v873 = vsub.f32 %v857, %v869
      %v874 = vmul.f32 %v870, 1.442695
      %v875 = vpow.pop %v874
      %v876 = vmul.f32 %v871, 1.442695
      %v877 = vpow.pop %v876
      %v878 = vmul.f32 %v872, 1.442695
      %v879 = vpow.pop %v878
      %v880 = vmul.f32 %v873, 1.442695
      %v881 = vpow.pop %v880
      %v882 = vsel %vm497, %v875, 0.0
      %883 = vadd.xlane.f32.xlu0 %v882
      %v884 = vpop.xlane.xlu0 %883
      %v885 = vsel %vm497, %v877, 0.0
      %886 = vadd.xlane.f32.xlu0 %v885
      %v887 = vpop.xlane.xlu0 %886
      %v888 = vsel %vm497, %v879, 0.0
      %889 = vadd.xlane.f32.xlu0 %v888
      %v890 = vpop.xlane.xlu0 %889
      %v891 = vsel %vm497, %v881, 0.0
      %892 = vadd.xlane.f32.xlu0 %v891
      %v893 = vpop.xlane.xlu0 %892
      %v894 = vlog2.pop %v884
      %v895 = vmul.f32 %v894, 0.6931472
      %v896 = vlog2.pop %v887
      %v897 = vmul.f32 %v896, 0.6931472
      %v898 = vlog2.pop %v890
      %v899 = vmul.f32 %v898, 0.6931472
      %v900 = vlog2.pop %v893
      %v901 = vmul.f32 %v900, 0.6931472
      %v902 = vsub.f32 %v870, %v895
      %v903 = vsub.f32 %v871, %v897
      %v904 = vsub.f32 %v872, %v899
      %v905 = vsub.f32 %v873, %v901
      %906 = vst.msk [vmem:[%s302] sm:$0xff] %vm497, %v902
      %907 = vst.msk [vmem:[%s302 + $0x8] sm:$0xff] %vm497, %v903
      %908 = vst.msk [vmem:[%s302 + $0x10] sm:$0xff] %vm497, %v904
      %909 = vst.msk [vmem:[%s302 + $0x18] sm:$0xff] %vm497, %v905
      %914 = vrot.lane.b32.xlu0 %v854, 8
      %v915 = vpop.permute.xlu0 %914
      %916 = vrot.lane.b32.xlu0 %v855, 8
      %v917 = vpop.permute.xlu0 %916
      %918 = vrot.lane.b32.xlu0 %v856, 8
      %v919 = vpop.permute.xlu0 %918
      %920 = vrot.lane.b32.xlu0 %v857, 8
      %v921 = vpop.permute.xlu0 %920
      %vm926 = vcmask 130112
      %927 = vst.msk [vmem:[%s302] sm:$0xff] %vm926, %v915
      %928 = vst.msk [vmem:[%s302 + $0x8] sm:$0xff] %vm926, %v917
      %929 = vst.msk [vmem:[%s302 + $0x10] sm:$0xff] %vm926, %v919
      %930 = vst.msk [vmem:[%s302 + $0x18] sm:$0xff] %vm926, %v921
      %s931 = smul.u32 4, %s18
      %p932 = scmp.lt.s32.totalorder %s931, 7
      %s933 = scalar_select %p932, %s931, 7
      %s934 = smul.addr %s933, 8
      %s935 = scalar_lea.vmem %s7, %s934
      // Predicated region
      $region49: #{gat_forward.3} parent=47 // pred_check
        %p936 = pneg %p193
      $region50: #{gat_forward.3} parent=47 // pred_check_branch
        %938 = sbr.rel (%p936) target = $region52
      $region51: #{gat_forward.3} parent=47 // pred_region
        %s939 = smul.u32 4, %s18
      $region52: #{gat_forward.3} parent=47 // pred_fallthru
        _
    $region48: #{gat_forward.3} parent=5 // pred_fallthru
      _
    %p940 = scmp.le.s32.totalorder 2, %s13
    // Predicated region
    $region53: #{gat_forward.3} parent=5 // pred_check
      %p941 = pneg %p940
    $region54: #{gat_forward.3} parent=5 // pred_check_branch
      %943 = sbr.rel (%p941) target = $region56
    $region55: #{gat_forward.3} parent=5 // pred_region
      %s944 = ssub.s32 %s13, 2
      // Predicated region
      $region57: #{gat_forward.3} parent=55 // pred_check
        %p945 = pneg %p199
      $region58: #{gat_forward.3} parent=55 // pred_check_branch
        %947 = sbr.rel (%p945) target = $region60
      $region59: #{gat_forward.3} parent=55 // pred_region
        %s948 = smul.u32 4, %s19
        %p949 = scmp.lt.s32.totalorder %s948, 7
        %s950 = scalar_select %p949, %s948, 7
        %s951 = smul.addr %s950, 8
        %s952 = scalar_lea.vmem %s7, %s951
      $region60: #{gat_forward.3} parent=55 // pred_fallthru
        _
    $region56: #{gat_forward.3} parent=5 // pred_fallthru
      _
  $region6: #{gat_forward.3} parent=0 // loop_footer
    %s17 = sadd.s32 1, %s13
  $region7: #{gat_forward.3} parent=0 // loop_footer_branch
    %12 = sbr.rel target = $region3
  $region8: #{gat_forward.3} parent=0 // loop_exit
    _

// kernel: gat_forward.2
$region0: #{gat_forward.2}
  #allocation0 [shape = 'u32[]', space=smem, size = 0x4, offset = 0x4, fixed_abs, tag = 'smem constant byte address 0x4 - core index']
  #allocation1 [shape = 'u32[144,128]{1,0:T(1,128)}', space=vmem, size = 0x12000, scoped, tag = 'internal scratch']
  %s0 = inlined_call_operand.vmem [shape: bf16[64,16], index: 0, kind: input, shape index: {}, may-alias: {0,1}]
  %s1 = inlined_call_operand.vmem [shape: bf16[64,16], index: 1, kind: input, shape index: {}, may-alias: {0,1}]
  %s2 = inlined_call_operand.vmem [shape: f32[64,64], index: 2, kind: input, shape index: {}]
  %s3 = inlined_call_operand.vmem [shape: bf16[16,32], index: 3, kind: input, shape index: {}]
  %s4 = inlined_call_operand.vmem [shape: f32[4,32], index: 4, kind: input, shape index: {}]
  %s5 = inlined_call_operand.vmem [shape: f32[32,4], index: 5, kind: input, shape index: {}]
  %s6 = inlined_call_operand.vmem [shape: f32[4,32], index: 6, kind: input, shape index: {}]
  %s7 = inlined_call_operand.vmem [shape: f32[1,32], index: 7, kind: input, shape index: {}]
  %s8 = inlined_call_operand.vmem [shape: f32[1,32], index: 8, kind: input, shape index: {}]
  %s9 = inlined_call_operand.vmem [shape: bf16[64,32], index: 9, kind: output, shape index: {}]
  %s10 = sld [smem:[#allocation0]]
  $region69: #{gat_forward.2} parent=0
    _
  %s12 = ssub.s32 1, %s10
  %s13 = scalar_select 0, %s12, %s10
  loop: start=0, step=1, limit=4
  $region2: #{gat_forward.2} parent=0 // loop_pre_header
    _
  $region3: #{gat_forward.2} parent=0 // loop_header
    %s15 = sphi 0, %s19
    %p16 = scmp.ge.s32.totalorder %s15, 4
    %s23 = sphi 0, %s23
    %s25 = sphi 0, %s23
    %s26 = sphi 0, %s25
    %s40 = sphi 0, %s26
    %s46 = sphi 0, %s48
    %s49 = sphi 0, %s46
    %s50 = sphi 0, %s49
    %s66 = sphi 0, %s50
    %s72 = sphi 0, %s74
    %s75 = sphi 0, %s72
    %s76 = sphi 0, %s75
    %s92 = sphi 0, %s76
    %s96 = sphi 0, %s96
    %s98 = sphi 0, %s96
    %s99 = sphi 0, %s98
    %s113 = sphi 0, %s99
    %s117 = sphi 0, %s117
    %s119 = sphi 0, %s117
    %s120 = sphi 0, %s119
    %s134 = sphi 0, %s120
    %s138 = sphi 0, %s138
    %s140 = sphi 0, %s138
    %s141 = sphi 0, %s140
    %s155 = sphi 0, %s141
    %s159 = sphi 0, %s159
    %s161 = sphi 0, %s159
    %s162 = sphi 0, %s161
    %s176 = sphi 0, %s162
    %s180 = sphi 0, %s180
    %s182 = sphi 0, %s180
    %s183 = sphi 0, %s182
    %s197 = sphi 0, %s183
    %s201 = sphi 0, %s201
    %s203 = sphi 0, %s201
    %s204 = sphi 0, %s203
    %s218 = sphi 0, %s204
    %s224 = sphi 0, %s226
    %s227 = sphi 0, %s224
    %s228 = sphi 0, %s227
    %s244 = sphi 0, %s228
  $region4: #{gat_forward.2} parent=0 // loop_header_branch
    %18 = sbr.rel (%p16) target = $region8
  $region5: #{gat_forward.2} parent=0 // loop_body
    %s20 = ssub.s32 %s15, 1
    %s21 = ssub.s32 %s15, 2
    %s22 = sadd.s32 %s15, 1
    %s24 = sadd.s32 %s23, 1
    %p27 = scmp.eq.s32.totalorder %s15, 1
    %p28 = scmp.ne.s32.totalorder %s23, %s25
    %p29 = scmp.eq.s32.totalorder %s15, 0
    %p30 = por %p28, %p29
    %p31 = scmp.ne.s32.totalorder %s23, %s25
    %p32 = scmp.eq.s32.totalorder %s20, 1
    %p33 = por %p31, %p32
    %p34 = scmp.ne.s32.totalorder %s25, %s26
    %p35 = scmp.eq.s32.totalorder %s20, 0
    %p36 = por %p34, %p35
    %p37 = scmp.ne.s32.totalorder %s25, %s26
    %p38 = scmp.eq.s32.totalorder %s21, 1
    %p39 = por %p37, %p38
    %p41 = scmp.ne.s32.totalorder %s26, %s40
    %p42 = scmp.eq.s32.totalorder %s21, 0
    %p43 = por %p41, %p42
    %s44 = ssub.s32 %s15, %s22
    %p45 = scmp.eq.s32.totalorder %s44, 0
    %s47 = sadd.s32 %s46, 1
    %s48 = scalar_select %p45, %s46, %s47
    %p51 = pneg %p45
    %p52 = scmp.eq.s32.totalorder %s15, 1
    %p53 = por %p51, %p52
    %p54 = scmp.ne.s32.totalorder %s46, %s49
    %p55 = scmp.eq.s32.totalorder %s15, 0
    %p56 = por %p54, %p55
    %p57 = scmp.ne.s32.totalorder %s46, %s49
    %p58 = scmp.eq.s32.totalorder %s20, 1
    %p59 = por %p57, %p58
    %p60 = scmp.ne.s32.totalorder %s49, %s50
    %p61 = scmp.eq.s32.totalorder %s20, 0
    %p62 = por %p60, %p61
    %p63 = scmp.ne.s32.totalorder %s49, %s50
    %p64 = scmp.eq.s32.totalorder %s21, 1
    %p65 = por %p63, %p64
    %p67 = scmp.ne.s32.totalorder %s50, %s66
    %p68 = scmp.eq.s32.totalorder %s21, 0
    %p69 = por %p67, %p68
    %s70 = ssub.s32 %s15, %s22
    %p71 = scmp.eq.s32.totalorder %s70, 0
    %s73 = sadd.s32 %s72, 1
    %s74 = scalar_select %p71, %s72, %s73
    %p77 = pneg %p71
    %p78 = scmp.eq.s32.totalorder %s15, 1
    %p79 = por %p77, %p78
    %p80 = scmp.ne.s32.totalorder %s72, %s75
    %p81 = scmp.eq.s32.totalorder %s15, 0
    %p82 = por %p80, %p81
    %p83 = scmp.ne.s32.totalorder %s72, %s75
    %p84 = scmp.eq.s32.totalorder %s20, 1
    %p85 = por %p83, %p84
    %p86 = scmp.ne.s32.totalorder %s75, %s76
    %p87 = scmp.eq.s32.totalorder %s20, 0
    %p88 = por %p86, %p87
    %p89 = scmp.ne.s32.totalorder %s75, %s76
    %p90 = scmp.eq.s32.totalorder %s21, 1
    %p91 = por %p89, %p90
    %p93 = scmp.ne.s32.totalorder %s76, %s92
    %p94 = scmp.eq.s32.totalorder %s21, 0
    %p95 = por %p93, %p94
    %s97 = sadd.s32 %s96, 1
    %p100 = scmp.eq.s32.totalorder %s15, 1
    %p101 = scmp.ne.s32.totalorder %s96, %s98
    %p102 = scmp.eq.s32.totalorder %s15, 0
    %p103 = por %p101, %p102
    %p104 = scmp.ne.s32.totalorder %s96, %s98
    %p105 = scmp.eq.s32.totalorder %s20, 1
    %p106 = por %p104, %p105
    %p107 = scmp.ne.s32.totalorder %s98, %s99
    %p108 = scmp.eq.s32.totalorder %s20, 0
    %p109 = por %p107, %p108
    %p110 = scmp.ne.s32.totalorder %s98, %s99
    %p111 = scmp.eq.s32.totalorder %s21, 1
    %p112 = por %p110, %p111
    %p114 = scmp.ne.s32.totalorder %s99, %s113
    %p115 = scmp.eq.s32.totalorder %s21, 0
    %p116 = por %p114, %p115
    %s118 = sadd.s32 %s117, 1
    %p121 = scmp.eq.s32.totalorder %s15, 1
    %p122 = scmp.ne.s32.totalorder %s117, %s119
    %p123 = scmp.eq.s32.totalorder %s15, 0
    %p124 = por %p122, %p123
    %p125 = scmp.ne.s32.totalorder %s117, %s119
    %p126 = scmp.eq.s32.totalorder %s20, 1
    %p127 = por %p125, %p126
    %p128 = scmp.ne.s32.totalorder %s119, %s120
    %p129 = scmp.eq.s32.totalorder %s20, 0
    %p130 = por %p128, %p129
    %p131 = scmp.ne.s32.totalorder %s119, %s120
    %p132 = scmp.eq.s32.totalorder %s21, 1
    %p133 = por %p131, %p132
    %p135 = scmp.ne.s32.totalorder %s120, %s134
    %p136 = scmp.eq.s32.totalorder %s21, 0
    %p137 = por %p135, %p136
    %s139 = sadd.s32 %s138, 1
    %p142 = scmp.eq.s32.totalorder %s15, 1
    %p143 = scmp.ne.s32.totalorder %s138, %s140
    %p144 = scmp.eq.s32.totalorder %s15, 0
    %p145 = por %p143, %p144
    %p146 = scmp.ne.s32.totalorder %s138, %s140
    %p147 = scmp.eq.s32.totalorder %s20, 1
    %p148 = por %p146, %p147
    %p149 = scmp.ne.s32.totalorder %s140, %s141
    %p150 = scmp.eq.s32.totalorder %s20, 0
    %p151 = por %p149, %p150
    %p152 = scmp.ne.s32.totalorder %s140, %s141
    %p153 = scmp.eq.s32.totalorder %s21, 1
    %p154 = por %p152, %p153
    %p156 = scmp.ne.s32.totalorder %s141, %s155
    %p157 = scmp.eq.s32.totalorder %s21, 0
    %p158 = por %p156, %p157
    %s160 = sadd.s32 %s159, 1
    %p163 = scmp.eq.s32.totalorder %s15, 1
    %p164 = scmp.ne.s32.totalorder %s159, %s161
    %p165 = scmp.eq.s32.totalorder %s15, 0
    %p166 = por %p164, %p165
    %p167 = scmp.ne.s32.totalorder %s159, %s161
    %p168 = scmp.eq.s32.totalorder %s20, 1
    %p169 = por %p167, %p168
    %p170 = scmp.ne.s32.totalorder %s161, %s162
    %p171 = scmp.eq.s32.totalorder %s20, 0
    %p172 = por %p170, %p171
    %p173 = scmp.ne.s32.totalorder %s161, %s162
    %p174 = scmp.eq.s32.totalorder %s21, 1
    %p175 = por %p173, %p174
    %p177 = scmp.ne.s32.totalorder %s162, %s176
    %p178 = scmp.eq.s32.totalorder %s21, 0
    %p179 = por %p177, %p178
    %s181 = sadd.s32 %s180, 1
    %p184 = scmp.eq.s32.totalorder %s15, 1
    %p185 = scmp.ne.s32.totalorder %s180, %s182
    %p186 = scmp.eq.s32.totalorder %s15, 0
    %p187 = por %p185, %p186
    %p188 = scmp.ne.s32.totalorder %s180, %s182
    %p189 = scmp.eq.s32.totalorder %s20, 1
    %p190 = por %p188, %p189
    %p191 = scmp.ne.s32.totalorder %s182, %s183
    %p192 = scmp.eq.s32.totalorder %s20, 0
    %p193 = por %p191, %p192
    %p194 = scmp.ne.s32.totalorder %s182, %s183
    %p195 = scmp.eq.s32.totalorder %s21, 1
    %p196 = por %p194, %p195
    %p198 = scmp.ne.s32.totalorder %s183, %s197
    %p199 = scmp.eq.s32.totalorder %s21, 0
    %p200 = por %p198, %p199
    %s202 = sadd.s32 %s201, 1
    %p205 = scmp.eq.s32.totalorder %s15, 1
    %p206 = scmp.ne.s32.totalorder %s201, %s203
    %p207 = scmp.eq.s32.totalorder %s15, 0
    %p208 = por %p206, %p207
    %p209 = scmp.ne.s32.totalorder %s201, %s203
    %p210 = scmp.eq.s32.totalorder %s20, 1
    %p211 = por %p209, %p210
    %p212 = scmp.ne.s32.totalorder %s203, %s204
    %p213 = scmp.eq.s32.totalorder %s20, 0
    %p214 = por %p212, %p213
    %p215 = scmp.ne.s32.totalorder %s203, %s204
    %p216 = scmp.eq.s32.totalorder %s21, 1
    %p217 = por %p215, %p216
    %p219 = scmp.ne.s32.totalorder %s204, %s218
    %p220 = scmp.eq.s32.totalorder %s21, 0
    %p221 = por %p219, %p220
    %s222 = ssub.s32 %s15, %s22
    %p223 = scmp.eq.s32.totalorder %s222, 0
    %s225 = sadd.s32 %s224, 1
    %s226 = scalar_select %p223, %s224, %s225
    %p229 = pneg %p223
    %p230 = scmp.eq.s32.totalorder %s15, 1
    %p231 = por %p229, %p230
    %p232 = scmp.ne.s32.totalorder %s224, %s227
    %p233 = scmp.eq.s32.totalorder %s15, 0
    %p234 = por %p232, %p233
    %p235 = scmp.ne.s32.totalorder %s224, %s227
    %p236 = scmp.eq.s32.totalorder %s20, 1
    %p237 = por %p235, %p236
    %p238 = scmp.ne.s32.totalorder %s227, %s228
    %p239 = scmp.eq.s32.totalorder %s20, 0
    %p240 = por %p238, %p239
    %p241 = scmp.ne.s32.totalorder %s227, %s228
    %p242 = scmp.eq.s32.totalorder %s21, 1
    %p243 = por %p241, %p242
    %p245 = scmp.ne.s32.totalorder %s228, %s244
    %p246 = scmp.eq.s32.totalorder %s21, 0
    %p247 = por %p245, %p246
    %p248 = scmp.le.s32.totalorder 1, %s15
    %p249 = scmp.lt.s32.totalorder %s15, 3
    %p250 = pnand %p248, %p249
    %p251 = pneg %p250
    // Predicated region
    $region9: #{gat_forward.2} parent=5 // pred_check
      _
    $region10: #{gat_forward.2} parent=5 // pred_check_branch
      %253 = sbr.rel (%p250) target = $region12
    $region11: #{gat_forward.2} parent=5 // pred_region
      %s254 = ssub.s32 %s15, 1
      // Predicated region
      $region13: #{gat_forward.2} parent=11 // pred_check
        %p255 = pneg %p36
      $region14: #{gat_forward.2} parent=11 // pred_check_branch
        %257 = sbr.rel (%p255) target = $region16
      $region15: #{gat_forward.2} parent=11 // pred_region
        _
      $region16: #{gat_forward.2} parent=11 // pred_fallthru
        _
      // Predicated region
      $region17: #{gat_forward.2} parent=11 // pred_check
        %p258 = pneg %p109
      $region18: #{gat_forward.2} parent=11 // pred_check_branch
        %260 = sbr.rel (%p258) target = $region20
      $region19: #{gat_forward.2} parent=11 // pred_region
        _
      $region20: #{gat_forward.2} parent=11 // pred_fallthru
        _
      // Predicated region
      $region21: #{gat_forward.2} parent=11 // pred_check
        %p261 = pneg %p130
      $region22: #{gat_forward.2} parent=11 // pred_check_branch
        %263 = sbr.rel (%p261) target = $region24
      $region23: #{gat_forward.2} parent=11 // pred_region
        _
      $region24: #{gat_forward.2} parent=11 // pred_fallthru
        _
      // Predicated region
      $region25: #{gat_forward.2} parent=11 // pred_check
        %p264 = pneg %p151
      $region26: #{gat_forward.2} parent=11 // pred_check_branch
        %266 = sbr.rel (%p264) target = $region28
      $region27: #{gat_forward.2} parent=11 // pred_region
        _
      $region28: #{gat_forward.2} parent=11 // pred_fallthru
        _
      // Predicated region
      $region29: #{gat_forward.2} parent=11 // pred_check
        %p267 = pneg %p172
      $region30: #{gat_forward.2} parent=11 // pred_check_branch
        %269 = sbr.rel (%p267) target = $region32
      $region31: #{gat_forward.2} parent=11 // pred_region
        _
      $region32: #{gat_forward.2} parent=11 // pred_fallthru
        _
      // Predicated region
      $region33: #{gat_forward.2} parent=11 // pred_check
        %p270 = pneg %p193
      $region34: #{gat_forward.2} parent=11 // pred_check_branch
        %272 = sbr.rel (%p270) target = $region36
      $region35: #{gat_forward.2} parent=11 // pred_region
        _
      $region36: #{gat_forward.2} parent=11 // pred_fallthru
        _
      // Predicated region
      $region37: #{gat_forward.2} parent=11 // pred_check
        %p273 = pneg %p214
      $region38: #{gat_forward.2} parent=11 // pred_check_branch
        %275 = sbr.rel (%p273) target = $region40
      $region39: #{gat_forward.2} parent=11 // pred_region
        _
      $region40: #{gat_forward.2} parent=11 // pred_fallthru
        _
    $region12: #{gat_forward.2} parent=5 // pred_fallthru
      _
    %p276 = scmp.lt.s32.totalorder %s15, 2
    // Predicated region
    $region41: #{gat_forward.2} parent=5 // pred_check
      %p277 = pneg %p276
    $region42: #{gat_forward.2} parent=5 // pred_check_branch
      %279 = sbr.rel (%p277) target = $region44
    $region43: #{gat_forward.2} parent=5 // pred_region
      // Predicated region
      $region45: #{gat_forward.2} parent=43 // pred_check
        %p280 = pneg %p56
      $region46: #{gat_forward.2} parent=43 // pred_check_branch
        %282 = sbr.rel (%p280) target = $region48
      $region47: #{gat_forward.2} parent=43 // pred_region
        %s283 = smul.u32 4, %s15
        %p284 = scmp.lt.s32.totalorder %s283, 7
        %s285 = scalar_select %p284, %s283, 7
        %s286 = smul.addr %s285, 4
        %s287 = scalar_lea.vmem %s1, %s286
        %s288 = smul.u32 4, %s15
      $region48: #{gat_forward.2} parent=43 // pred_fallthru
        _
      // Predicated region
      $region49: #{gat_forward.2} parent=43 // pred_check
        %p289 = pneg %p82
      $region50: #{gat_forward.2} parent=43 // pred_check_branch
        %291 = sbr.rel (%p289) target = $region52
      $region51: #{gat_forward.2} parent=43 // pred_region
        %s292 = smul.u32 4, %s15
        %p293 = scmp.lt.s32.totalorder %s292, 7
        %s294 = scalar_select %p293, %s292, 7
        %s295 = smul.addr %s294, 8
        %s296 = scalar_lea.vmem %s2, %s295
        %s297 = smul.u32 4, %s15
      $region52: #{gat_forward.2} parent=43 // pred_fallthru
        _
    $region44: #{gat_forward.2} parent=5 // pred_fallthru
      _
    %p298 = scmp.le.s32.totalorder 1, %s15
    %p299 = scmp.lt.s32.totalorder %s15, 3
    %p300 = pnand %p298, %p299
    %p301 = pneg %p300
    // Predicated region
    $region53: #{gat_forward.2} parent=5 // pred_check
      _
    $region54: #{gat_forward.2} parent=5 // pred_check_branch
      %303 = sbr.rel (%p300) target = $region56
    $region55: #{gat_forward.2} parent=5 // pred_region
      %s304 = ssub.s32 %s15, 1
      %p305 = pneg %p36
      %p306 = pneg %p33
      %s307 = smul.u32 4, %s20
      %p308 = scmp.lt.s32.totalorder %s307, 7
      %s309 = scalar_select %p308, %s307, 7
      %s310 = smul.addr %s309, 4
      %s311 = scalar_lea.vmem %s1, %s310
      %p312 = pneg %p62
      %p313 = pneg %p59
      %s314 = smul.u32 4, %s20
      %p315 = scmp.lt.s32.totalorder %s314, 7
      %s316 = scalar_select %p315, %s314, 7
      %s317 = smul.addr %s316, 8
      %s318 = scalar_lea.vmem %s2, %s317
      %p319 = pneg %p88
      %p320 = pneg %p85
      %p321 = pneg %p109
      %p322 = pneg %p106
      %p323 = pneg %p130
      %p324 = pneg %p127
      %p325 = pneg %p151
      %p326 = pneg %p148
      %p327 = pneg %p172
      %p328 = pneg %p169
      %p329 = pneg %p193
      %p330 = pneg %p190
      %p331 = pneg %p214
      %p332 = pneg %p211
      %p333 = pneg %p240
      %p334 = pneg %p237
      %s335 = smul.u32 4, %s20
      %p336 = scmp.lt.s32.totalorder %s335, 7
      %s337 = scalar_select %p336, %s335, 7
      %s338 = smul.addr %s337, 4
      %s339 = scalar_lea.vmem %s9, %s338
      %s340 = smul.u32 4, %s20
      %p341 = scmp.lt.s32.totalorder %s340, 7
      %s342 = scalar_select %p341, %s340, 7
      %s343 = smul.addr %s342, 4
      %s344 = scalar_lea.vmem %s1, %s343
      %s345 = smul.u32 4, %s20
      %s346 = smul.u32 4, %s20
      %p347 = scmp.lt.s32.totalorder %s346, 7
      %s348 = scalar_select %p347, %s346, 7
      %s349 = smul.addr %s348, 8
      %s350 = scalar_lea.vmem %s2, %s349
      %s351 = smul.u32 4, %s20
      %s352 = smul.u32 4, %s20
      %p353 = scmp.lt.s32.totalorder %s352, 7
      %s354 = scalar_select %p353, %s352, 7
      %s355 = smul.addr %s354, 4
      %s356 = scalar_lea.vmem %s9, %s355
      %s357 = smul.u32 4, %s20
      %v359 = vld [vmem:[%s0] sm:$0xf]
      %v360 = vld [vmem:[%s0 + $0x4] sm:$0xf]
      %v361 = vld [vmem:[%s0 + $0x8] sm:$0xf]
      %v362 = vld [vmem:[%s0 + $0xc] sm:$0xf]
      %v363 = vld [vmem:[%s0 + $0x10] sm:$0xf]
      %v364 = vld [vmem:[%s0 + $0x14] sm:$0xf]
      %v365 = vld [vmem:[%s0 + $0x18] sm:$0xf]
      %v366 = vld [vmem:[%s0 + $0x1c] sm:$0xf]
      %v367 = vld [vmem:[%s3] sm:$0xf]
      %v368 = vld [vmem:[%s3 + $0x4] sm:$0xf]
      %v377 = vunpack.c.l.b16 %v359
      %v378 = vunpack.c.l.b16 %v360
      %v379 = vunpack.c.l.b16 %v361
      %v380 = vunpack.c.l.b16 %v362
      %v381 = vunpack.c.l.b16 %v363
      %v382 = vunpack.c.l.b16 %v364
      %v383 = vunpack.c.l.b16 %v365
      %v384 = vunpack.c.l.b16 %v366
      %v385 = vpack.c.b16 %v378, %v377
      %v386 = vpack.c.b16 %v380, %v379
      %v387 = vpack.c.b16 %v382, %v381
      %v388 = vpack.c.b16 %v384, %v383
      %v391 = vunpack.c.l.b16 %v367
      %v392 = vunpack.c.l.b16 %v368
      %v393 = vpack.c.b16 %v392, %v391
      %vm395 = vcmask 130048
      %v397 = vsel %vm395, %v385, 0
      %v400 = vsel %vm395, %v386, 0
      %v403 = vsel %vm395, %v387, 0
      %v406 = vsel %vm395, %v388, 0
      %408 = vmatprep.subr.bf16.mxu0 0
      %409 = vmatpush1.bf16.msra.mxu0 %v393
      %410 = vmatprep.subr.bf16.mxu0 0
      %411 = vmatpush1.bf16.msra.mxu0 0
      %412 = vmatprep.subr.bf16.mxu0 0
      %413 = vmatpush1.bf16.msra.mxu0 0
      %414 = vmatprep.subr.bf16.mxu0 0
      %415 = vmatpush1.bf16.msra.mxu0 0
      %416 = vmatprep.subr.bf16.mxu0 0
      %417 = vmatpush1.bf16.msra.mxu0 0
      %418 = vmatprep.subr.bf16.mxu0 0
      %419 = vmatpush1.bf16.msra.mxu0 0
      %420 = vmatprep.subr.bf16.mxu0 0
      %421 = vmatpush1.bf16.msra.mxu0 0
      %422 = vmatprep.subr.bf16.mxu0 0
      %423 = vmatpush1.bf16.msra.mxu0 0
      %424 = vmatprep.subr.bf16.mxu0 0
      %425 = vmatpush1.bf16.msra.mxu0 0
      %426 = vmatprep.subr.bf16.mxu0 0
      %427 = vmatpush1.bf16.msra.mxu0 0
      %428 = vmatprep.subr.bf16.mxu0 0
      %429 = vmatpush1.bf16.msra.mxu0 0
      %430 = vmatprep.subr.bf16.mxu0 0
      %431 = vmatpush1.bf16.msra.mxu0 0
      %432 = vmatprep.subr.bf16.mxu0 0
      %433 = vmatpush1.bf16.msra.mxu0 0
      %434 = vmatprep.subr.bf16.mxu0 0
      %435 = vmatpush1.bf16.msra.mxu0 0
      %436 = vmatprep.subr.bf16.mxu0 0
      %437 = vmatpush1.bf16.msra.mxu0 0
      %438 = vmatprep.subr.bf16.mxu0 0
      %439 = vmatpush1.bf16.msra.mxu0 0
      %440 = vmatprep.mubr.bf16.mxu0 0
      %441 = vmatmul.mubr.bf16.gmra.mrb[0].mxu0 %v397
      %v442 = vpop.f32.mrb[0].mxu0
      %v443 = vadd.f32 0.0, %v442
      %v444 = vpop.f32.mrb[0].mxu0
      %v445 = vpop.f32.mrb[0].mxu0
      %v446 = vadd.f32 0.0, %v445
      %v447 = vpop.f32.mrb[0].mxu0
      %448 = vmatprep.mubr.bf16.mxu0 0
      %449 = vmatmul.mubr.bf16.gmra.mrb[0].mxu0 %v400
      %v450 = vpop.f32.mrb[0].mxu0
      %v451 = vadd.f32 0.0, %v450
      %v452 = vpop.f32.mrb[0].mxu0
      %v453 = vpop.f32.mrb[0].mxu0
      %v454 = vadd.f32 0.0, %v453
      %v455 = vpop.f32.mrb[0].mxu0
      %456 = vmatprep.mubr.bf16.mxu0 0
      %457 = vmatmul.mubr.bf16.gmra.mrb[0].mxu0 %v403
      %v458 = vpop.f32.mrb[0].mxu0
      %v459 = vadd.f32 0.0, %v458
      %v460 = vpop.f32.mrb[0].mxu0
      %v461 = vpop.f32.mrb[0].mxu0
      %v462 = vadd.f32 0.0, %v461
      %v463 = vpop.f32.mrb[0].mxu0
      %464 = vmatprep.mubr.bf16.mxu0 0
      %465 = vmatmul.mubr.bf16.gmra.mrb[0].mxu0 %v406
      %v466 = vpop.f32.mrb[0].mxu0
      %v467 = vadd.f32 0.0, %v466
      %v468 = vpop.f32.mrb[0].mxu0
      %v469 = vpop.f32.mrb[0].mxu0
      %v470 = vadd.f32 0.0, %v469
      %v471 = vpop.f32.mrb[0].mxu0
      %472 = vdwg.mxu0
      %v473 = vld [vmem:[%s344] sm:$0xf]
      %v474 = vld [vmem:[%s344 + $0x4] sm:$0xf]
      %v475 = vld [vmem:[%s344 + $0x8] sm:$0xf]
      %v476 = vld [vmem:[%s344 + $0xc] sm:$0xf]
      %v481 = vunpack.c.l.b16 %v473
      %v482 = vunpack.c.l.b16 %v474
      %v483 = vunpack.c.l.b16 %v475
      %v484 = vunpack.c.l.b16 %v476
      %v485 = vpack.c.b16 %v482, %v481
      %v486 = vpack.c.b16 %v484, %v483
      %v488 = vsel %vm395, %v485, 0
      %v491 = vsel %vm395, %v486, 0
      %493 = vmatprep.subr.bf16.mxu0 0
      %494 = vmatpush1.bf16.msra.mxu0 %v393
      %495 = vmatprep.subr.bf16.mxu0 0
      %496 = vmatpush1.bf16.msra.mxu0 0
      %497 = vmatprep.subr.bf16.mxu0 0
      %498 = vmatpush1.bf16.msra.mxu0 0
      %499 = vmatprep.subr.bf16.mxu0 0
      %500 = vmatpush1.bf16.msra.mxu0 0
      %501 = vmatprep.subr.bf16.mxu0 0
      %502 = vmatpush1.bf16.msra.mxu0 0
      %503 = vmatprep.subr.bf16.mxu0 0
      %504 = vmatpush1.bf16.msra.mxu0 0
      %505 = vmatprep.subr.bf16.mxu0 0
      %506 = vmatpush1.bf16.msra.mxu0 0
      %507 = vmatprep.subr.bf16.mxu0 0
      %508 = vmatpush1.bf16.msra.mxu0 0
      %509 = vmatprep.subr.bf16.mxu0 0
      %510 = vmatpush1.bf16.msra.mxu0 0
      %511 = vmatprep.subr.bf16.mxu0 0
      %512 = vmatpush1.bf16.msra.mxu0 0
      %513 = vmatprep.subr.bf16.mxu0 0
      %514 = vmatpush1.bf16.msra.mxu0 0
      %515 = vmatprep.subr.bf16.mxu0 0
      %516 = vmatpush1.bf16.msra.mxu0 0
      %517 = vmatprep.subr.bf16.mxu0 0
      %518 = vmatpush1.bf16.msra.mxu0 0
      %519 = vmatprep.subr.bf16.mxu0 0
      %520 = vmatpush1.bf16.msra.mxu0 0
      %521 = vmatprep.subr.bf16.mxu0 0
      %522 = vmatpush1.bf16.msra.mxu0 0
      %523 = vmatprep.subr.bf16.mxu0 0
      %524 = vmatpush1.bf16.msra.mxu0 0
      %525 = vmatprep.mubr.bf16.mxu0 0
      %526 = vmatmul.mubr.bf16.gmra.mrb[0].mxu0 %v488
      %v527 = vpop.f32.mrb[0].mxu0
      %v528 = vadd.f32 0.0, %v527
      %v529 = vpop.f32.mrb[0].mxu0
      %v530 = vpop.f32.mrb[0].mxu0
      %v531 = vadd.f32 0.0, %v530
      %v532 = vpop.f32.mrb[0].mxu0
      %533 = vmatprep.mubr.bf16.mxu0 0
      %534 = vmatmul.mubr.bf16.gmra.mrb[0].mxu0 %v491
      %v535 = vpop.f32.mrb[0].mxu0
      %v536 = vadd.f32 0.0, %v535
      %v537 = vpop.f32.mrb[0].mxu0
      %v538 = vpop.f32.mrb[0].mxu0
      %v539 = vadd.f32 0.0, %v538
      %v540 = vpop.f32.mrb[0].mxu0
      %541 = vdwg.mxu0
      %v542 = vld [vmem:[%s4] sm:$0xf]
      %vm543 = vcmask 261120
      %v545 = vsel %vm543, %v542, 0
      %v548 = vsel %vm543, %v443, 0
      %v551 = vsel %vm543, %v446, 0
      %v554 = vsel %vm543, %v451, 0
      %v557 = vsel %vm543, %v454, 0
      %v560 = vsel %vm543, %v459, 0
      %v563 = vsel %vm543, %v462, 0
      %v566 = vsel %vm543, %v467, 0
      %v569 = vsel %vm543, %v470, 0
      %571 = vmatprep.subr.mxu0 0.0
      %572 = vmatpush1.xpose.msra.mxu0 %v548
      %573 = vmatprep.subr.mxu0 0.0
      %574 = vmatpush1.xpose.msra.mxu0 %v551
      %575 = vmatprep.subr.mxu0 0.0
      %576 = vmatpush1.xpose.msra.mxu0 %v554
      %577 = vmatprep.subr.mxu0 0.0
      %578 = vmatpush1.xpose.msra.mxu0 %v557
      %579 = vmatprep.subr.mxu0 0.0
      %580 = vmatpush1.xpose.msra.mxu0 %v560
      %581 = vmatprep.subr.mxu0 0.0
      %582 = vmatpush1.xpose.msra.mxu0 %v563
      %583 = vmatprep.subr.mxu0 0.0
      %584 = vmatpush1.xpose.msra.mxu0 %v566
      %585 = vmatprep.subr.mxu0 0.0
      %586 = vmatpush1.xpose.msra.mxu0 %v569
      %587 = vmatprep.subr.mxu0 0.0
      %588 = vmatpush1.xpose.msra.mxu0 0.0
      %589 = vmatprep.subr.mxu0 0.0
      %590 = vmatpush1.xpose.msra.mxu0 0.0
      %591 = vmatprep.subr.mxu0 0.0
      %592 = vmatpush1.xpose.msra.mxu0 0.0
      %593 = vmatprep.subr.mxu0 0.0
      %594 = vmatpush1.xpose.msra.mxu0 0.0
      %595 = vmatprep.subr.mxu0 0.0
      %596 = vmatpush1.xpose.msra.mxu0 0.0
      %597 = vmatprep.subr.mxu0 0.0
      %598 = vmatpush1.xpose.msra.mxu0 0.0
      %599 = vmatprep.subr.mxu0 0.0
      %600 = vmatpush1.xpose.msra.mxu0 0.0
      %601 = vmatprep.subr.mxu0 0.0
      %602 = vmatpush1.xpose.msra.mxu0 0.0
      %603 = vmatprep.subr.mxu0 0.0
      %604 = vmatpush1.xpose.msra.mxu0 0.0
      %605 = vmatprep.subr.mxu0 0.0
      %606 = vmatpush1.xpose.msra.mxu0 0.0
      %607 = vmatprep.subr.mxu0 0.0
      %608 = vmatpush1.xpose.msra.mxu0 0.0
      %609 = vmatprep.subr.mxu0 0.0
      %610 = vmatpush1.xpose.msra.mxu0 0.0
      %611 = vmatprep.subr.mxu0 0.0
      %612 = vmatpush1.xpose.msra.mxu0 0.0
      %613 = vmatprep.subr.mxu0 0.0
      %614 = vmatpush1.xpose.msra.mxu0 0.0
      %615 = vmatprep.subr.mxu0 0.0
      %616 = vmatpush1.xpose.msra.mxu0 0.0
      %617 = vmatprep.subr.mxu0 0.0
      %618 = vmatpush1.xpose.msra.mxu0 0.0
      %619 = vmatprep.subr.mxu0 0.0
      %620 = vmatpush1.xpose.msra.mxu0 0.0
      %621 = vmatprep.subr.mxu0 0.0
      %622 = vmatpush1.xpose.msra.mxu0 0.0
      %623 = vmatprep.subr.mxu0 0.0
      %624 = vmatpush1.xpose.msra.mxu0 0.0
      %625 = vmatprep.subr.mxu0 0.0
      %626 = vmatpush1.xpose.msra.mxu0 0.0
      %627 = vmatprep.subr.mxu0 0.0
      %628 = vmatpush1.xpose.msra.mxu0 0.0
      %629 = vmatprep.subr.mxu0 0.0
      %630 = vmatpush1.xpose.msra.mxu0 0.0
      %631 = vmatprep.subr.mxu0 0.0
      %632 = vmatpush1.xpose.msra.mxu0 0.0
      %633 = vmatprep.subr.mxu0 0.0
      %634 = vmatpush1.xpose.msra.mxu0 0.0
      %635 = vmatprep.mubr.f32.mxu0 0.0
      %636 = vmatmul.mubr.f32.gmra.mrb[0].mxu0 %v545
      %v637 = vpop.f32.mrb[0].mxu0
      %v638 = vadd.f32 0.0, %v637
      %v639 = vpop.f32.mrb[0].mxu0
      %640 = vdwg.mxu0
      %v641 = vld [vmem:[%s5] sm:$0xff]
      %v642 = vld [vmem:[%s5 + $0x8] sm:$0xff]
      %v643 = vld [vmem:[%s5 + $0x10] sm:$0xff]
      %v644 = vld [vmem:[%s5 + $0x18] sm:$0xff]
      %v646 = vsel %vm543, %v528, 0
      %v649 = vsel %vm543, %v531, 0
      %v652 = vsel %vm543, %v536, 0
      %v655 = vsel %vm543, %v539, 0
      %657 = vmatprep.subr.mxu0 0.0
      %658 = vmatpush1.msra.mxu0 %v641
      %659 = vmatprep.subr.mxu0 0.0
      %660 = vmatpush1.msra.mxu0 %v642
      %661 = vmatprep.subr.mxu0 0.0
      %662 = vmatpush1.msra.mxu0 %v643
      %663 = vmatprep.subr.mxu0 0.0
      %664 = vmatpush1.msra.mxu0 %v644
      %665 = vmatprep.subr.mxu0 0.0
      %666 = vmatpush1.msra.mxu0 0.0
      %667 = vmatprep.subr.mxu0 0.0
      %668 = vmatpush1.msra.mxu0 0.0
      %669 = vmatprep.subr.mxu0 0.0
      %670 = vmatpush1.msra.mxu0 0.0
      %671 = vmatprep.subr.mxu0 0.0
      %672 = vmatpush1.msra.mxu0 0.0
      %673 = vmatprep.subr.mxu0 0.0
      %674 = vmatpush1.msra.mxu0 0.0
      %675 = vmatprep.subr.mxu0 0.0
      %676 = vmatpush1.msra.mxu0 0.0
      %677 = vmatprep.subr.mxu0 0.0
      %678 = vmatpush1.msra.mxu0 0.0
      %679 = vmatprep.subr.mxu0 0.0
      %680 = vmatpush1.msra.mxu0 0.0
      %681 = vmatprep.subr.mxu0 0.0
      %682 = vmatpush1.msra.mxu0 0.0
      %683 = vmatprep.subr.mxu0 0.0
      %684 = vmatpush1.msra.mxu0 0.0
      %685 = vmatprep.subr.mxu0 0.0
      %686 = vmatpush1.msra.mxu0 0.0
      %687 = vmatprep.subr.mxu0 0.0
      %688 = vmatpush1.msra.mxu0 0.0
      %689 = vmatprep.subr.mxu0 0.0
      %690 = vmatpush1.msra.mxu0 0.0
      %691 = vmatprep.subr.mxu0 0.0
      %692 = vmatpush1.msra.mxu0 0.0
      %693 = vmatprep.subr.mxu0 0.0
      %694 = vmatpush1.msra.mxu0 0.0
      %695 = vmatprep.subr.mxu0 0.0
      %696 = vmatpush1.msra.mxu0 0.0
      %697 = vmatprep.subr.mxu0 0.0
      %698 = vmatpush1.msra.mxu0 0.0
      %699 = vmatprep.subr.mxu0 0.0
      %700 = vmatpush1.msra.mxu0 0.0
      %701 = vmatprep.subr.mxu0 0.0
      %702 = vmatpush1.msra.mxu0 0.0
      %703 = vmatprep.subr.mxu0 0.0
      %704 = vmatpush1.msra.mxu0 0.0
      %705 = vmatprep.subr.mxu0 0.0
      %706 = vmatpush1.msra.mxu0 0.0
      %707 = vmatprep.subr.mxu0 0.0
      %708 = vmatpush1.msra.mxu0 0.0
      %709 = vmatprep.subr.mxu0 0.0
      %710 = vmatpush1.msra.mxu0 0.0
      %711 = vmatprep.subr.mxu0 0.0
      %712 = vmatpush1.msra.mxu0 0.0
      %713 = vmatprep.subr.mxu0 0.0
      %714 = vmatpush1.msra.mxu0 0.0
      %715 = vmatprep.subr.mxu0 0.0
      %716 = vmatpush1.msra.mxu0 0.0
      %717 = vmatprep.subr.mxu0 0.0
      %718 = vmatpush1.msra.mxu0 0.0
      %719 = vmatprep.subr.mxu0 0.0
      %720 = vmatpush1.msra.mxu0 0.0
      %721 = vmatprep.mubr.f32.mxu0 0.0
      %722 = vmatmul.mubr.f32.gmra.mrb[0].mxu0 %v646
      %v723 = vpop.f32.mrb[0].mxu0
      %v724 = vadd.f32 0.0, %v723
      %v725 = vpop.f32.mrb[0].mxu0
      %726 = vmatprep.mubr.f32.mxu0 0.0
      %727 = vmatmul.mubr.f32.gmra.mrb[0].mxu0 %v649
      %v728 = vpop.f32.mrb[0].mxu0
      %v729 = vadd.f32 0.0, %v728
      %v730 = vpop.f32.mrb[0].mxu0
      %731 = vmatprep.mubr.f32.mxu0 0.0
      %732 = vmatmul.mubr.f32.gmra.mrb[0].mxu0 %v652
      %v733 = vpop.f32.mrb[0].mxu0
      %v734 = vadd.f32 0.0, %v733
      %v735 = vpop.f32.mrb[0].mxu0
      %736 = vmatprep.mubr.f32.mxu0 0.0
      %737 = vmatmul.mubr.f32.gmra.mrb[0].mxu0 %v655
      %v738 = vpop.f32.mrb[0].mxu0
      %v739 = vadd.f32 0.0, %v738
      %v740 = vpop.f32.mrb[0].mxu0
      %741 = vdwg.mxu0
      %v742 = vld [vmem:[%s350] sm:$0xff]
      %v743 = vld [vmem:[%s350 + $0x8] sm:$0xff]
      %v744 = vld [vmem:[%s350 + $0x10] sm:$0xff]
      %v745 = vld [vmem:[%s350 + $0x18] sm:$0xff]
      %v746 = vld [vmem:[%s6] sm:$0xf]
      %748 = vset.pattern.permute.xlu0 0
      %749 = vperm.xlu0 %748, %v724
      %v750 = vpop.permute.xlu0 %749
      %753 = vset.pattern.permute.xlu0 0
      %754 = vperm.xlu0 %753, %v729
      %v755 = vpop.permute.xlu0 %754
      %758 = vset.pattern.permute.xlu0 0
      %759 = vperm.xlu0 %758, %v734
      %v760 = vpop.permute.xlu0 %759
      %763 = vset.pattern.permute.xlu0 0
      %764 = vperm.xlu0 %763, %v739
      %v765 = vpop.permute.xlu0 %764
      %v767 = vlaneseq
      %v768 = vshrl.u32 %v767, 7
      %v769 = vsub.s32 0, %v768
      %v770 = vrot.slane %v638, %v769
      %v771 = vadd.f32 %v750, %v770
      %v772 = vadd.f32 %v755, %v770
      %v773 = vadd.f32 %v760, %v770
      %v774 = vadd.f32 %v765, %v770
      %v775 = vmul.f32 %v771, 0.2
      %v776 = vmul.f32 %v772, 0.2
      %v777 = vmul.f32 %v773, 0.2
      %v778 = vmul.f32 %v774, 0.2
      %v779 = vmax.f32 %v771, %v775
      %v780 = vmax.f32 %v772, %v776
      %v781 = vmax.f32 %v773, %v777
      %v782 = vmax.f32 %v774, %v778
      %v783 = vadd.f32 %v779, %v742
      %v784 = vadd.f32 %v780, %v743
      %v785 = vadd.f32 %v781, %v744
      %v786 = vadd.f32 %v782, %v745
      %vm787 = vcmask 523264
      %v788 = vsel %vm787, %v783, -inf
      %789 = vmax.xlane.f32.xlu0 %v788
      %v790 = vpop.xlane.xlu0 %789
      %v791 = vsel %vm787, %v784, -inf
      %792 = vmax.xlane.f32.xlu0 %v791
      %v793 = vpop.xlane.xlu0 %792
      %v794 = vsel %vm787, %v785, -inf
      %795 = vmax.xlane.f32.xlu0 %v794
      %v796 = vpop.xlane.xlu0 %795
      %v797 = vsel %vm787, %v786, -inf
      %798 = vmax.xlane.f32.xlu0 %v797
      %v799 = vpop.xlane.xlu0 %798
      %v800 = vsub.f32 %v783, %v790
      %v801 = vsub.f32 %v784, %v793
      %v802 = vsub.f32 %v785, %v796
      %v803 = vsub.f32 %v786, %v799
      %v804 = vmul.f32 %v800, 1.442695
      %v805 = vpow.pop %v804
      %v806 = vmul.f32 %v801, 1.442695
      %v807 = vpow.pop %v806
      %v808 = vmul.f32 %v802, 1.442695
      %v809 = vpow.pop %v808
      %v810 = vmul.f32 %v803, 1.442695
      %v811 = vpow.pop %v810
      %v812 = vsel %vm787, %v805, 0.0
      %813 = vadd.xlane.f32.xlu0 %v812
      %v814 = vpop.xlane.xlu0 %813
      %v815 = vsel %vm787, %v807, 0.0
      %816 = vadd.xlane.f32.xlu0 %v815
      %v817 = vpop.xlane.xlu0 %816
      %v818 = vsel %vm787, %v809, 0.0
      %819 = vadd.xlane.f32.xlu0 %v818
      %v820 = vpop.xlane.xlu0 %819
      %v821 = vsel %vm787, %v811, 0.0
      %822 = vadd.xlane.f32.xlu0 %v821
      %v823 = vpop.xlane.xlu0 %822
      %v824 = vmax.f32 %v814, 1e-20
      %v825 = vmax.f32 %v817, 1e-20
      %v826 = vmax.f32 %v820, 1e-20
      %v827 = vmax.f32 %v823, 1e-20
      %v828 = vlaneseq
      %v829 = vshrl.u32 %v828, 7
      %v830 = vsub.s32 0, %v829
      %v831 = vrot.slane %v746, %v830
      %v832 = vmul.f32 %v443, %v831
      %v833 = vmul.f32 %v446, %v831
      %v834 = vmul.f32 %v451, %v831
      %v835 = vmul.f32 %v454, %v831
      %v836 = vmul.f32 %v459, %v831
      %v837 = vmul.f32 %v462, %v831
      %v838 = vmul.f32 %v467, %v831
      %v839 = vmul.f32 %v470, %v831
      %v840 = vpack.c.bf16 %v807, %v805
      %v841 = vpack.c.bf16 %v811, %v809
      %v842 = vpack.c.bf16 %v833, %v832
      %v843 = vpack.c.bf16 %v835, %v834
      %v844 = vpack.c.bf16 %v837, %v836
      %v845 = vpack.c.bf16 %v839, %v838
      %v847 = vsel %vm787, %v840, 0
      %v850 = vsel %vm787, %v841, 0
      %852 = vmatprep.subr.bf16.mxu0 0
      %853 = vmatpush1.bf16.msra.mxu0 %v842
      %854 = vmatprep.subr.bf16.mxu0 0
      %855 = vmatpush1.bf16.msra.mxu0 %v843
      %856 = vmatprep.subr.bf16.mxu0 0
      %857 = vmatpush1.bf16.msra.mxu0 %v844
      %858 = vmatprep.subr.bf16.mxu0 0
      %859 = vmatpush1.bf16.msra.mxu0 %v845
      %860 = vmatprep.subr.bf16.mxu0 0
      %861 = vmatpush1.bf16.msra.mxu0 0
      %862 = vmatprep.subr.bf16.mxu0 0
      %863 = vmatpush1.bf16.msra.mxu0 0
      %864 = vmatprep.subr.bf16.mxu0 0
      %865 = vmatpush1.bf16.msra.mxu0 0
      %866 = vmatprep.subr.bf16.mxu0 0
      %867 = vmatpush1.bf16.msra.mxu0 0
      %868 = vmatprep.subr.bf16.mxu0 0
      %869 = vmatpush1.bf16.msra.mxu0 0
      %870 = vmatprep.subr.bf16.mxu0 0
      %871 = vmatpush1.bf16.msra.mxu0 0
      %872 = vmatprep.subr.bf16.mxu0 0
      %873 = vmatpush1.bf16.msra.mxu0 0
      %874 = vmatprep.subr.bf16.mxu0 0
      %875 = vmatpush1.bf16.msra.mxu0 0
      %876 = vmatprep.subr.bf16.mxu0 0
      %877 = vmatpush1.bf16.msra.mxu0 0
      %878 = vmatprep.subr.bf16.mxu0 0
      %879 = vmatpush1.bf16.msra.mxu0 0
      %880 = vmatprep.subr.bf16.mxu0 0
      %881 = vmatpush1.bf16.msra.mxu0 0
      %882 = vmatprep.subr.bf16.mxu0 0
      %883 = vmatpush1.bf16.msra.mxu0 0
      %884 = vmatprep.mubr.bf16.mxu0 0
      %885 = vmatmul.mubr.bf16.gmra.mrb[0].mxu0 %v847
      %v886 = vpop.f32.mrb[0].mxu0
      %v887 = vadd.f32 0.0, %v886
      %v888 = vpop.f32.mrb[0].mxu0
      %v889 = vpop.f32.mrb[0].mxu0
      %v890 = vadd.f32 0.0, %v889
      %v891 = vpop.f32.mrb[0].mxu0
      %892 = vmatprep.mubr.bf16.mxu0 0
      %893 = vmatmul.mubr.bf16.gmra.mrb[0].mxu0 %v850
      %v894 = vpop.f32.mrb[0].mxu0
      %v895 = vadd.f32 0.0, %v894
      %v896 = vpop.f32.mrb[0].mxu0
      %v897 = vpop.f32.mrb[0].mxu0
      %v898 = vadd.f32 0.0, %v897
      %v899 = vpop.f32.mrb[0].mxu0
      %900 = vdwg.mxu0
      %v901 = vrcp.pop %v824
      %v902 = vrcp.pop %v825
      %v903 = vrcp.pop %v826
      %v904 = vrcp.pop %v827
      %v905 = vmul.f32 %v887, %v901
      %v906 = vmul.f32 %v890, %v902
      %v907 = vmul.f32 %v895, %v903
      %v908 = vmul.f32 %v898, %v904
      %909 = vset.pattern.permute.xlu0 1
      %910 = vperm.xlu0 %909, %v724
      %v911 = vpop.permute.xlu0 %910
      %913 = vset.pattern.permute.xlu0 1
      %914 = vperm.xlu0 %913, %v729
      %v915 = vpop.permute.xlu0 %914
      %917 = vset.pattern.permute.xlu0 1
      %918 = vperm.xlu0 %917, %v734
      %v919 = vpop.permute.xlu0 %918
      %921 = vset.pattern.permute.xlu0 1
      %922 = vperm.xlu0 %921, %v739
      %v923 = vpop.permute.xlu0 %922
      %v925 = vlaneseq
      %v926 = vshrl.u32 %v925, 7
      %v927 = vsub.s32 1, %v926
      %v928 = vrot.slane %v638, %v927
      %v929 = vadd.f32 %v911, %v928
      %v930 = vadd.f32 %v915, %v928
      %v931 = vadd.f32 %v919, %v928
      %v932 = vadd.f32 %v923, %v928
      %v933 = vmul.f32 %v929, 0.2
      %v934 = vmul.f32 %v930, 0.2
      %v935 = vmul.f32 %v931, 0.2
      %v936 = vmul.f32 %v932, 0.2
      %v937 = vmax.f32 %v929, %v933
      %v938 = vmax.f32 %v930, %v934
      %v939 = vmax.f32 %v931, %v935
      %v940 = vmax.f32 %v932, %v936
      %v941 = vadd.f32 %v937, %v742
      %v942 = vadd.f32 %v938, %v743
      %v943 = vadd.f32 %v939, %v744
      %v944 = vadd.f32 %v940, %v745
      %v945 = vsel %vm787, %v941, -inf
      %946 = vmax.xlane.f32.xlu0 %v945
      %v947 = vpop.xlane.xlu0 %946
      %v948 = vsel %vm787, %v942, -inf
      %949 = vmax.xlane.f32.xlu0 %v948
      %v950 = vpop.xlane.xlu0 %949
      %v951 = vsel %vm787, %v943, -inf
      %952 = vmax.xlane.f32.xlu0 %v951
      %v953 = vpop.xlane.xlu0 %952
      %v954 = vsel %vm787, %v944, -inf
      %955 = vmax.xlane.f32.xlu0 %v954
      %v956 = vpop.xlane.xlu0 %955
      %v957 = vsub.f32 %v941, %v947
      %v958 = vsub.f32 %v942, %v950
      %v959 = vsub.f32 %v943, %v953
      %v960 = vsub.f32 %v944, %v956
      %v961 = vmul.f32 %v957, 1.442695
      %v962 = vpow.pop %v961
      %v963 = vmul.f32 %v958, 1.442695
      %v964 = vpow.pop %v963
      %v965 = vmul.f32 %v959, 1.442695
      %v966 = vpow.pop %v965
      %v967 = vmul.f32 %v960, 1.442695
      %v968 = vpow.pop %v967
      %v969 = vsel %vm787, %v962, 0.0
      %970 = vadd.xlane.f32.xlu0 %v969
      %v971 = vpop.xlane.xlu0 %970
      %v972 = vsel %vm787, %v964, 0.0
      %973 = vadd.xlane.f32.xlu0 %v972
      %v974 = vpop.xlane.xlu0 %973
      %v975 = vsel %vm787, %v966, 0.0
      %976 = vadd.xlane.f32.xlu0 %v975
      %v977 = vpop.xlane.xlu0 %976
      %v978 = vsel %vm787, %v968, 0.0
      %979 = vadd.xlane.f32.xlu0 %v978
      %v980 = vpop.xlane.xlu0 %979
      %v981 = vmax.f32 %v971, 1e-20
      %v982 = vmax.f32 %v974, 1e-20
      %v983 = vmax.f32 %v977, 1e-20
      %v984 = vmax.f32 %v980, 1e-20
      %v985 = vlaneseq
      %v986 = vshrl.u32 %v985, 7
      %v987 = vsub.s32 1, %v986
      %v988 = vrot.slane %v746, %v987
      %v989 = vmul.f32 %v443, %v988
      %v990 = vmul.f32 %v446, %v988
      %v991 = vmul.f32 %v451, %v988
      %v992 = vmul.f32 %v454, %v988
      %v993 = vmul.f32 %v459, %v988
      %v994 = vmul.f32 %v462, %v988
      %v995 = vmul.f32 %v467, %v988
      %v996 = vmul.f32 %v470, %v988
      %v997 = vpack.c.bf16 %v964, %v962
      %v998 = vpack.c.bf16 %v968, %v966
      %v999 = vpack.c.bf16 %v990, %v989
      %v1000 = vpack.c.bf16 %v992, %v991
      %v1001 = vpack.c.bf16 %v994, %v993
      %v1002 = vpack.c.bf16 %v996, %v995
      %v1004 = vsel %vm787, %v997, 0
      %v1007 = vsel %vm787, %v998, 0
      %1009 = vmatprep.subr.bf16.mxu0 0
      %1010 = vmatpush1.bf16.msra.mxu0 %v999
      %1011 = vmatprep.subr.bf16.mxu0 0
      %1012 = vmatpush1.bf16.msra.mxu0 %v1000
      %1013 = vmatprep.subr.bf16.mxu0 0
      %1014 = vmatpush1.bf16.msra.mxu0 %v1001
      %1015 = vmatprep.subr.bf16.mxu0 0
      %1016 = vmatpush1.bf16.msra.mxu0 %v1002
      %1017 = vmatprep.subr.bf16.mxu0 0
      %1018 = vmatpush1.bf16.msra.mxu0 0
      %1019 = vmatprep.subr.bf16.mxu0 0
      %1020 = vmatpush1.bf16.msra.mxu0 0
      %1021 = vmatprep.subr.bf16.mxu0 0
      %1022 = vmatpush1.bf16.msra.mxu0 0
      %1023 = vmatprep.subr.bf16.mxu0 0
      %1024 = vmatpush1.bf16.msra.mxu0 0
      %1025 = vmatprep.subr.bf16.mxu0 0
      %1026 = vmatpush1.bf16.msra.mxu0 0
      %1027 = vmatprep.subr.bf16.mxu0 0
      %1028 = vmatpush1.bf16.msra.mxu0 0
      %1029 = vmatprep.subr.bf16.mxu0 0
      %1030 = vmatpush1.bf16.msra.mxu0 0
      %1031 = vmatprep.subr.bf16.mxu0 0
      %1032 = vmatpush1.bf16.msra.mxu0 0
      %1033 = vmatprep.subr.bf16.mxu0 0
      %1034 = vmatpush1.bf16.msra.mxu0 0
      %1035 = vmatprep.subr.bf16.mxu0 0
      %1036 = vmatpush1.bf16.msra.mxu0 0
      %1037 = vmatprep.subr.bf16.mxu0 0
      %1038 = vmatpush1.bf16.msra.mxu0 0
      %1039 = vmatprep.subr.bf16.mxu0 0
      %1040 = vmatpush1.bf16.msra.mxu0 0
      %1041 = vmatprep.mubr.bf16.mxu0 0
      %1042 = vmatmul.mubr.bf16.gmra.mrb[0].mxu0 %v1004
      %v1043 = vpop.f32.mrb[0].mxu0
      %v1044 = vadd.f32 0.0, %v1043
      %v1045 = vpop.f32.mrb[0].mxu0
      %v1046 = vpop.f32.mrb[0].mxu0
      %v1047 = vadd.f32 0.0, %v1046
      %v1048 = vpop.f32.mrb[0].mxu0
      %1049 = vmatprep.mubr.bf16.mxu0 0
      %1050 = vmatmul.mubr.bf16.gmra.mrb[0].mxu0 %v1007
      %v1051 = vpop.f32.mrb[0].mxu0
      %v1052 = vadd.f32 0.0, %v1051
      %v1053 = vpop.f32.mrb[0].mxu0
      %v1054 = vpop.f32.mrb[0].mxu0
      %v1055 = vadd.f32 0.0, %v1054
      %v1056 = vpop.f32.mrb[0].mxu0
      %1057 = vdwg.mxu0
      %v1058 = vrcp.pop %v981
      %v1059 = vrcp.pop %v982
      %v1060 = vrcp.pop %v983
      %v1061 = vrcp.pop %v984
      %v1062 = vmul.f32 %v1044, %v1058
      %v1063 = vmul.f32 %v1047, %v1059
      %v1064 = vmul.f32 %v1052, %v1060
      %v1065 = vmul.f32 %v1055, %v1061
      %v1066 = vadd.f32 %v905, %v1062
      %v1067 = vadd.f32 %v906, %v1063
      %v1068 = vadd.f32 %v907, %v1064
      %v1069 = vadd.f32 %v908, %v1065
      %1070 = vset.pattern.permute.xlu0 2
      %1071 = vperm.xlu0 %1070, %v724
      %v1072 = vpop.permute.xlu0 %1071
      %1074 = vset.pattern.permute.xlu0 2
      %1075 = vperm.xlu0 %1074, %v729
      %v1076 = vpop.permute.xlu0 %1075
      %1078 = vset.pattern.permute.xlu0 2
      %1079 = vperm.xlu0 %1078, %v734
      %v1080 = vpop.permute.xlu0 %1079
      %1082 = vset.pattern.permute.xlu0 2
      %1083 = vperm.xlu0 %1082, %v739
      %v1084 = vpop.permute.xlu0 %1083
      %v1086 = vlaneseq
      %v1087 = vshrl.u32 %v1086, 7
      %v1088 = vsub.s32 2, %v1087
      %v1089 = vrot.slane %v638, %v1088
      %v1090 = vadd.f32 %v1072, %v1089
      %v1091 = vadd.f32 %v1076, %v1089
      %v1092 = vadd.f32 %v1080, %v1089
      %v1093 = vadd.f32 %v1084, %v1089
      %v1094 = vmul.f32 %v1090, 0.2
      %v1095 = vmul.f32 %v1091, 0.2
      %v1096 = vmul.f32 %v1092, 0.2
      %v1097 = vmul.f32 %v1093, 0.2
      %v1098 = vmax.f32 %v1090, %v1094
      %v1099 = vmax.f32 %v1091, %v1095
      %v1100 = vmax.f32 %v1092, %v1096
      %v1101 = vmax.f32 %v1093, %v1097
      %v1102 = vadd.f32 %v1098, %v742
      %v1103 = vadd.f32 %v1099, %v743
      %v1104 = vadd.f32 %v1100, %v744
      %v1105 = vadd.f32 %v1101, %v745
      %v1106 = vsel %vm787, %v1102, -inf
      %1107 = vmax.xlane.f32.xlu0 %v1106
      %v1108 = vpop.xlane.xlu0 %1107
      %v1109 = vsel %vm787, %v1103, -inf
      %1110 = vmax.xlane.f32.xlu0 %v1109
      %v1111 = vpop.xlane.xlu0 %1110
      %v1112 = vsel %vm787, %v1104, -inf
      %1113 = vmax.xlane.f32.xlu0 %v1112
      %v1114 = vpop.xlane.xlu0 %1113
      %v1115 = vsel %vm787, %v1105, -inf
      %1116 = vmax.xlane.f32.xlu0 %v1115
      %v1117 = vpop.xlane.xlu0 %1116
      %v1118 = vsub.f32 %v1102, %v1108
      %v1119 = vsub.f32 %v1103, %v1111
      %v1120 = vsub.f32 %v1104, %v1114
      %v1121 = vsub.f32 %v1105, %v1117
      %v1122 = vmul.f32 %v1118, 1.442695
      %v1123 = vpow.pop %v1122
      %v1124 = vmul.f32 %v1119, 1.442695
      %v1125 = vpow.pop %v1124
      %v1126 = vmul.f32 %v1120, 1.442695
      %v1127 = vpow.pop %v1126
      %v1128 = vmul.f32 %v1121, 1.442695
      %v1129 = vpow.pop %v1128
      %v1130 = vsel %vm787, %v1123, 0.0
      %1131 = vadd.xlane.f32.xlu0 %v1130
      %v1132 = vpop.xlane.xlu0 %1131
      %v1133 = vsel %vm787, %v1125, 0.0
      %1134 = vadd.xlane.f32.xlu0 %v1133
      %v1135 = vpop.xlane.xlu0 %1134
      %v1136 = vsel %vm787, %v1127, 0.0
      %1137 = vadd.xlane.f32.xlu0 %v1136
      %v1138 = vpop.xlane.xlu0 %1137
      %v1139 = vsel %vm787, %v1129, 0.0
      %1140 = vadd.xlane.f32.xlu0 %v1139
      %v1141 = vpop.xlane.xlu0 %1140
      %v1142 = vmax.f32 %v1132, 1e-20
      %v1143 = vmax.f32 %v1135, 1e-20
      %v1144 = vmax.f32 %v1138, 1e-20
      %v1145 = vmax.f32 %v1141, 1e-20
      %v1146 = vlaneseq
      %v1147 = vshrl.u32 %v1146, 7
      %v1148 = vsub.s32 2, %v1147
      %v1149 = vrot.slane %v746, %v1148
      %v1150 = vmul.f32 %v443, %v1149
      %v1151 = vmul.f32 %v446, %v1149
      %v1152 = vmul.f32 %v451, %v1149
      %v1153 = vmul.f32 %v454, %v1149
      %v1154 = vmul.f32 %v459, %v1149
      %v1155 = vmul.f32 %v462, %v1149
      %v1156 = vmul.f32 %v467, %v1149
      %v1157 = vmul.f32 %v470, %v1149
      %v1158 = vpack.c.bf16 %v1125, %v1123
      %v1159 = vpack.c.bf16 %v1129, %v1127
      %v1160 = vpack.c.bf16 %v1151, %v1150
      %v1161 = vpack.c.bf16 %v1153, %v1152
      %v1162 = vpack.c.bf16 %v1155, %v1154
      %v1163 = vpack.c.bf16 %v1157, %v1156
      %v1165 = vsel %vm787, %v1158, 0
      %v1168 = vsel %vm787, %v1159, 0
      %1170 = vmatprep.subr.bf16.mxu0 0
      %1171 = vmatpush1.bf16.msra.mxu0 %v1160
      %1172 = vmatprep.subr.bf16.mxu0 0
      %1173 = vmatpush1.bf16.msra.mxu0 %v1161
      %1174 = vmatprep.subr.bf16.mxu0 0
      %1175 = vmatpush1.bf16.msra.mxu0 %v1162
      %1176 = vmatprep.subr.bf16.mxu0 0
      %1177 = vmatpush1.bf16.msra.mxu0 %v1163
      %1178 = vmatprep.subr.bf16.mxu0 0
      %1179 = vmatpush1.bf16.msra.mxu0 0
      %1180 = vmatprep.subr.bf16.mxu0 0
      %1181 = vmatpush1.bf16.msra.mxu0 0
      %1182 = vmatprep.subr.bf16.mxu0 0
      %1183 = vmatpush1.bf16.msra.mxu0 0
      %1184 = vmatprep.subr.bf16.mxu0 0
      %1185 = vmatpush1.bf16.msra.mxu0 0
      %1186 = vmatprep.subr.bf16.mxu0 0
      %1187 = vmatpush1.bf16.msra.mxu0 0
      %1188 = vmatprep.subr.bf16.mxu0 0
      %1189 = vmatpush1.bf16.msra.mxu0 0
      %1190 = vmatprep.subr.bf16.mxu0 0
      %1191 = vmatpush1.bf16.msra.mxu0 0
      %1192 = vmatprep.subr.bf16.mxu0 0
      %1193 = vmatpush1.bf16.msra.mxu0 0
      %1194 = vmatprep.subr.bf16.mxu0 0
      %1195 = vmatpush1.bf16.msra.mxu0 0
      %1196 = vmatprep.subr.bf16.mxu0 0
      %1197 = vmatpush1.bf16.msra.mxu0 0
      %1198 = vmatprep.subr.bf16.mxu0 0
      %1199 = vmatpush1.bf16.msra.mxu0 0
      %1200 = vmatprep.subr.bf16.mxu0 0
      %1201 = vmatpush1.bf16.msra.mxu0 0
      %1202 = vmatprep.mubr.bf16.mxu0 0
      %1203 = vmatmul.mubr.bf16.gmra.mrb[0].mxu0 %v1165
      %v1204 = vpop.f32.mrb[0].mxu0
      %v1205 = vadd.f32 0.0, %v1204
      %v1206 = vpop.f32.mrb[0].mxu0
      %v1207 = vpop.f32.mrb[0].mxu0
      %v1208 = vadd.f32 0.0, %v1207
      %v1209 = vpop.f32.mrb[0].mxu0
      %1210 = vmatprep.mubr.bf16.mxu0 0
      %1211 = vmatmul.mubr.bf16.gmra.mrb[0].mxu0 %v1168
      %v1212 = vpop.f32.mrb[0].mxu0
      %v1213 = vadd.f32 0.0, %v1212
      %v1214 = vpop.f32.mrb[0].mxu0
      %v1215 = vpop.f32.mrb[0].mxu0
      %v1216 = vadd.f32 0.0, %v1215
      %v1217 = vpop.f32.mrb[0].mxu0
      %1218 = vdwg.mxu0
      %v1219 = vrcp.pop %v1142
      %v1220 = vrcp.pop %v1143
      %v1221 = vrcp.pop %v1144
      %v1222 = vrcp.pop %v1145
      %v1223 = vmul.f32 %v1205, %v1219
      %v1224 = vmul.f32 %v1208, %v1220
      %v1225 = vmul.f32 %v1213, %v1221
      %v1226 = vmul.f32 %v1216, %v1222
      %v1227 = vadd.f32 %v1066, %v1223
      %v1228 = vadd.f32 %v1067, %v1224
      %v1229 = vadd.f32 %v1068, %v1225
      %v1230 = vadd.f32 %v1069, %v1226
      %1231 = vset.pattern.permute.xlu0 3
      %1232 = vperm.xlu0 %1231, %v724
      %v1233 = vpop.permute.xlu0 %1232
      %1235 = vset.pattern.permute.xlu0 3
      %1236 = vperm.xlu0 %1235, %v729
      %v1237 = vpop.permute.xlu0 %1236
      %1239 = vset.pattern.permute.xlu0 3
      %1240 = vperm.xlu0 %1239, %v734
      %v1241 = vpop.permute.xlu0 %1240
      %1243 = vset.pattern.permute.xlu0 3
      %1244 = vperm.xlu0 %1243, %v739
      %v1245 = vpop.permute.xlu0 %1244
      %v1247 = vlaneseq
      %v1248 = vshrl.u32 %v1247, 7
      %v1249 = vsub.s32 3, %v1248
      %v1250 = vrot.slane %v638, %v1249
      %v1251 = vadd.f32 %v1233, %v1250
      %v1252 = vadd.f32 %v1237, %v1250
      %v1253 = vadd.f32 %v1241, %v1250
      %v1254 = vadd.f32 %v1245, %v1250
      %v1255 = vmul.f32 %v1251, 0.2
      %v1256 = vmul.f32 %v1252, 0.2
      %v1257 = vmul.f32 %v1253, 0.2
      %v1258 = vmul.f32 %v1254, 0.2
      %v1259 = vmax.f32 %v1251, %v1255
      %v1260 = vmax.f32 %v1252, %v1256
      %v1261 = vmax.f32 %v1253, %v1257
      %v1262 = vmax.f32 %v1254, %v1258
      %v1263 = vadd.f32 %v1259, %v742
      %v1264 = vadd.f32 %v1260, %v743
      %v1265 = vadd.f32 %v1261, %v744
      %v1266 = vadd.f32 %v1262, %v745
      %v1267 = vsel %vm787, %v1263, -inf
      %1268 = vmax.xlane.f32.xlu0 %v1267
      %v1269 = vpop.xlane.xlu0 %1268
      %v1270 = vsel %vm787, %v1264, -inf
      %1271 = vmax.xlane.f32.xlu0 %v1270
      %v1272 = vpop.xlane.xlu0 %1271
      %v1273 = vsel %vm787, %v1265, -inf
      %1274 = vmax.xlane.f32.xlu0 %v1273
      %v1275 = vpop.xlane.xlu0 %1274
      %v1276 = vsel %vm787, %v1266, -inf
      %1277 = vmax.xlane.f32.xlu0 %v1276
      %v1278 = vpop.xlane.xlu0 %1277
      %v1279 = vsub.f32 %v1263, %v1269
      %v1280 = vsub.f32 %v1264, %v1272
      %v1281 = vsub.f32 %v1265, %v1275
      %v1282 = vsub.f32 %v1266, %v1278
      %v1283 = vmul.f32 %v1279, 1.442695
      %v1284 = vpow.pop %v1283
      %v1285 = vmul.f32 %v1280, 1.442695
      %v1286 = vpow.pop %v1285
      %v1287 = vmul.f32 %v1281, 1.442695
      %v1288 = vpow.pop %v1287
      %v1289 = vmul.f32 %v1282, 1.442695
      %v1290 = vpow.pop %v1289
      %v1291 = vsel %vm787, %v1284, 0.0
      %1292 = vadd.xlane.f32.xlu0 %v1291
      %v1293 = vpop.xlane.xlu0 %1292
      %v1294 = vsel %vm787, %v1286, 0.0
      %1295 = vadd.xlane.f32.xlu0 %v1294
      %v1296 = vpop.xlane.xlu0 %1295
      %v1297 = vsel %vm787, %v1288, 0.0
      %1298 = vadd.xlane.f32.xlu0 %v1297
      %v1299 = vpop.xlane.xlu0 %1298
      %v1300 = vsel %vm787, %v1290, 0.0
      %1301 = vadd.xlane.f32.xlu0 %v1300
      %v1302 = vpop.xlane.xlu0 %1301
      %v1303 = vmax.f32 %v1293, 1e-20
      %v1304 = vmax.f32 %v1296, 1e-20
      %v1305 = vmax.f32 %v1299, 1e-20
      %v1306 = vmax.f32 %v1302, 1e-20
      %v1307 = vlaneseq
      %v1308 = vshrl.u32 %v1307, 7
      %v1309 = vsub.s32 3, %v1308
      %v1310 = vrot.slane %v746, %v1309
      %v1311 = vmul.f32 %v443, %v1310
      %v1312 = vmul.f32 %v446, %v1310
      %v1313 = vmul.f32 %v451, %v1310
      %v1314 = vmul.f32 %v454, %v1310
      %v1315 = vmul.f32 %v459, %v1310
      %v1316 = vmul.f32 %v462, %v1310
      %v1317 = vmul.f32 %v467, %v1310
      %v1318 = vmul.f32 %v470, %v1310
      %v1319 = vpack.c.bf16 %v1286, %v1284
      %v1320 = vpack.c.bf16 %v1290, %v1288
      %v1321 = vpack.c.bf16 %v1312, %v1311
      %v1322 = vpack.c.bf16 %v1314, %v1313
      %v1323 = vpack.c.bf16 %v1316, %v1315
      %v1324 = vpack.c.bf16 %v1318, %v1317
      %v1326 = vsel %vm787, %v1319, 0
      %v1329 = vsel %vm787, %v1320, 0
      %1331 = vmatprep.subr.bf16.mxu0 0
      %1332 = vmatpush1.bf16.msra.mxu0 %v1321
      %1333 = vmatprep.subr.bf16.mxu0 0
      %1334 = vmatpush1.bf16.msra.mxu0 %v1322
      %1335 = vmatprep.subr.bf16.mxu0 0
      %1336 = vmatpush1.bf16.msra.mxu0 %v1323
      %1337 = vmatprep.subr.bf16.mxu0 0
      %1338 = vmatpush1.bf16.msra.mxu0 %v1324
      %1339 = vmatprep.subr.bf16.mxu0 0
      %1340 = vmatpush1.bf16.msra.mxu0 0
      %1341 = vmatprep.subr.bf16.mxu0 0
      %1342 = vmatpush1.bf16.msra.mxu0 0
      %1343 = vmatprep.subr.bf16.mxu0 0
      %1344 = vmatpush1.bf16.msra.mxu0 0
      %1345 = vmatprep.subr.bf16.mxu0 0
      %1346 = vmatpush1.bf16.msra.mxu0 0
      %1347 = vmatprep.subr.bf16.mxu0 0
      %1348 = vmatpush1.bf16.msra.mxu0 0
      %1349 = vmatprep.subr.bf16.mxu0 0
      %1350 = vmatpush1.bf16.msra.mxu0 0
      %1351 = vmatprep.subr.bf16.mxu0 0
      %1352 = vmatpush1.bf16.msra.mxu0 0
      %1353 = vmatprep.subr.bf16.mxu0 0
      %1354 = vmatpush1.bf16.msra.mxu0 0
      %1355 = vmatprep.subr.bf16.mxu0 0
      %1356 = vmatpush1.bf16.msra.mxu0 0
      %1357 = vmatprep.subr.bf16.mxu0 0
      %1358 = vmatpush1.bf16.msra.mxu0 0
      %1359 = vmatprep.subr.bf16.mxu0 0
      %1360 = vmatpush1.bf16.msra.mxu0 0
      %1361 = vmatprep.subr.bf16.mxu0 0
      %1362 = vmatpush1.bf16.msra.mxu0 0
      %1363 = vmatprep.mubr.bf16.mxu0 0
      %1364 = vmatmul.mubr.bf16.gmra.mrb[0].mxu0 %v1326
      %v1365 = vpop.f32.mrb[0].mxu0
      %v1366 = vadd.f32 0.0, %v1365
      %v1367 = vpop.f32.mrb[0].mxu0
      %v1368 = vpop.f32.mrb[0].mxu0
      %v1369 = vadd.f32 0.0, %v1368
      %v1370 = vpop.f32.mrb[0].mxu0
      %1371 = vmatprep.mubr.bf16.mxu0 0
      %1372 = vmatmul.mubr.bf16.gmra.mrb[0].mxu0 %v1329
      %v1373 = vpop.f32.mrb[0].mxu0
      %v1374 = vadd.f32 0.0, %v1373
      %v1375 = vpop.f32.mrb[0].mxu0
      %v1376 = vpop.f32.mrb[0].mxu0
      %v1377 = vadd.f32 0.0, %v1376
      %v1378 = vpop.f32.mrb[0].mxu0
      %1379 = vdwg.mxu0
      %v1380 = vrcp.pop %v1303
      %v1381 = vrcp.pop %v1304
      %v1382 = vrcp.pop %v1305
      %v1383 = vrcp.pop %v1306
      %v1384 = vmul.f32 %v1366, %v1380
      %v1385 = vmul.f32 %v1369, %v1381
      %v1386 = vmul.f32 %v1374, %v1382
      %v1387 = vmul.f32 %v1377, %v1383
      %v1388 = vadd.f32 %v1227, %v1384
      %v1389 = vadd.f32 %v1228, %v1385
      %v1390 = vadd.f32 %v1229, %v1386
      %v1391 = vadd.f32 %v1230, %v1387
      %v1392 = vld [vmem:[%s7] sm:$0x1]
      %v1394 = vlaneseq
      %v1395 = vshrl.u32 %v1394, 7
      %v1396 = vsub.s32 0, %v1395
      %v1397 = vrot.slane %v1392, %v1396
      %v1399 = vmul.f32 %v1388, %v1397
      %v1400 = vmul.f32 %v1389, %v1397
      %v1401 = vmul.f32 %v1390, %v1397
      %v1402 = vmul.f32 %v1391, %v1397
      %v1403 = vld [vmem:[%s8] sm:$0x1]
      %v1405 = vlaneseq
      %v1406 = vshrl.u32 %v1405, 7
      %v1407 = vsub.s32 0, %v1406
      %v1408 = vrot.slane %v1403, %v1407
      %v1410 = vadd.f32 %v1399, %v1408
      %v1411 = vadd.f32 %v1400, %v1408
      %v1412 = vadd.f32 %v1401, %v1408
      %v1413 = vadd.f32 %v1402, %v1408
      %v1414 = vmax.f32 %v1410, 0.0
      %v1415 = vmax.f32 %v1411, 0.0
      %v1416 = vmax.f32 %v1412, 0.0
      %v1417 = vmax.f32 %v1413, 0.0
      %v1418 = vpack.c.bf16 %v1415, %v1414
      %v1419 = vpack.c.bf16 %v1417, %v1416
      %v1422 = vunpack.c.l.b16 %v1418
      %v1423 = vunpack.c.h.b16 %v1418
      %v1424 = vunpack.c.l.b16 %v1419
      %v1425 = vunpack.c.h.b16 %v1419
      %v1426 = vpack.c.b16 %v1422, %v1422
      %v1427 = vpack.c.b16 %v1423, %v1423
      %v1428 = vpack.c.b16 %v1424, %v1424
      %v1429 = vpack.c.b16 %v1425, %v1425
      %vm1434 = vcmask 257024
      %1435 = vst.msk [vmem:[%s356] sm:$0xf] %vm1434, %v1426
      %1436 = vst.msk [vmem:[%s356 + $0x4] sm:$0xf] %vm1434, %v1427
      %1437 = vst.msk [vmem:[%s356 + $0x8] sm:$0xf] %vm1434, %v1428
      %1438 = vst.msk [vmem:[%s356 + $0xc] sm:$0xf] %vm1434, %v1429
      %s1439 = smul.u32 4, %s20
      %p1440 = scmp.lt.s32.totalorder %s1439, 7
      %s1441 = scalar_select %p1440, %s1439, 7
      %s1442 = smul.addr %s1441, 4
      %s1443 = scalar_lea.vmem %s9, %s1442
      // Predicated region
      $region57: #{gat_forward.2} parent=55 // pred_check
        %p1444 = pneg %p237
      $region58: #{gat_forward.2} parent=55 // pred_check_branch
        %1446 = sbr.rel (%p1444) target = $region60
      $region59: #{gat_forward.2} parent=55 // pred_region
        %s1447 = smul.u32 4, %s20
      $region60: #{gat_forward.2} parent=55 // pred_fallthru
        _
    $region56: #{gat_forward.2} parent=5 // pred_fallthru
      _
    %p1448 = scmp.le.s32.totalorder 2, %s15
    // Predicated region
    $region61: #{gat_forward.2} parent=5 // pred_check
      %p1449 = pneg %p1448
    $region62: #{gat_forward.2} parent=5 // pred_check_branch
      %1451 = sbr.rel (%p1449) target = $region64
    $region63: #{gat_forward.2} parent=5 // pred_region
      %s1452 = ssub.s32 %s15, 2
      // Predicated region
      $region65: #{gat_forward.2} parent=63 // pred_check
        %p1453 = pneg %p243
      $region66: #{gat_forward.2} parent=63 // pred_check_branch
        %1455 = sbr.rel (%p1453) target = $region68
      $region67: #{gat_forward.2} parent=63 // pred_region
        %s1456 = smul.u32 4, %s21
        %p1457 = scmp.lt.s32.totalorder %s1456, 7
        %s1458 = scalar_select %p1457, %s1456, 7
        %s1459 = smul.addr %s1458, 4
        %s1460 = scalar_lea.vmem %s9, %s1459
      $region68: #{gat_forward.2} parent=63 // pred_fallthru
        _
    $region64: #{gat_forward.2} parent=5 // pred_fallthru
      _
  $region6: #{gat_forward.2} parent=0 // loop_footer
    %s19 = sadd.s32 1, %s15
  $region7: #{gat_forward.2} parent=0 // loop_footer_branch
    %14 = sbr.rel target = $region3
  $region8: #{gat_forward.2} parent=0 // loop_exit
    _

</llo_original>
